<compile_context>
chip_gen: v5e
topology: v5e:2x2
jax: 0.10.0
libtpu: 0.0.40
codegen_flags: <defaults>
</compile_context>

<pallas_src>
import math

import jax
import jax.numpy as jnp
from jax.experimental import pallas as pl
from jax.experimental.pallas import tpu as pltpu

BN_EPS = 1e-5


def fc_bn_kernel(attr_ref, w_ref, gamma_ref, beta_ref, out_ref):
    # attr: (B, K=6)   w: (K, TD)   gamma/beta: (1, TD)   out: (B, TD)
    attr = attr_ref[...]
    w = w_ref[...]
    k_in = w.shape[0]

    # Linear, bias-free (bias cancels under batch-stat BatchNorm).  K=6 and B is
    # tiny, so a handful of broadcast FMAs on the VPU beats an MXU matmul that
    # would be padded to (8,128)x(128,TD) with <0.1% utilization.
    z = attr[:, 0:1] * w[0:1, :]
    for k in range(1, k_in):
        z = z + attr[:, k:k + 1] * w[k:k + 1, :]

    # BatchNorm1d(track_running_stats=False): batch statistics, biased variance.
    # Valid per-tile because the reduction axis (batch) is fully resident.
    mean = jnp.mean(z, axis=0, keepdims=True)
    zc = z - mean
    var = jnp.mean(jnp.square(zc), axis=0, keepdims=True)
    scale = gamma_ref[...] * jax.lax.rsqrt(var + BN_EPS)   # folded affine
    out_ref[...] = (scale * zc + beta_ref[...]).astype(out_ref.dtype)


def _pick_block_d(d, max_block_d):
    """Largest lane-dense tile: multiple of 128, divides D, <= max_block_d.

    Default policy is "maximize block_d": the whole problem is a few hundred KB,
    so a single grid step is best.  Tiling only kicks in for very large D, where
    2 * (K + 2 + B) * block_d * 4 bytes (double-buffered) must stay under the
    32 MiB scoped-VMEM default (v5e/v6e/v7x) -- max_block_d=64K gives ~5 MiB.
    """
    if d <= max_block_d:
        return d                    # single full block (always a legal BlockSpec)
    if d % 128 != 0:
        return d                    # can't tile lane-densely; keep one full block
    block_d = (max_block_d // 128) * 128
    while d % block_d != 0:         # terminates at 128 since d % 128 == 0
        block_d -= 128
    return block_d


def fc_feature_pallas(attr, w, gamma, beta, *, max_block_d=64 * 1024,
                      out_dtype=jnp.float32):
    b, k_in = attr.shape
    d = w.shape[1]
    block_d = _pick_block_d(d, max_block_d)
    grid = (d // block_d,)

    cost = pl.CostEstimate(
        flops=2 * b * k_in * d + 8 * b * d,     # FMAs + BN arithmetic
        transcendentals=d,                      # rsqrt per feature
        bytes_accessed=4 * (b * k_in + k_in * d + 2 * d + b * d),
    )

    return pl.pallas_call(
        fc_bn_kernel,
        out_shape=jax.ShapeDtypeStruct((b, d), out_dtype),
        grid_spec=pltpu.PrefetchScalarGridSpec(
            num_scalar_prefetch=0,
            grid=grid,
            in_specs=[
                pl.BlockSpec((b, k_in), lambda j: (0, 0)),        # attribute (resident)
                pl.BlockSpec((k_in, block_d), lambda j: (0, j)),  # W (in, out)
                pl.BlockSpec((1, block_d), lambda j: (0, j)),     # bn gamma
                pl.BlockSpec((1, block_d), lambda j: (0, j)),     # bn beta
            ],
            out_specs=pl.BlockSpec((b, block_d), lambda j: (0, j)),
        ),
        # "parallel" lets v7x shard the D axis across its 2 TensorCores whenever
        # D is big enough to produce >=2 grid steps; at grid=(1,) it is a no-op.
        compiler_params=pltpu.CompilerParams(
            dimension_semantics=("parallel",)),
        cost_estimate=cost,
    )(attr, w, gamma, beta)


class MergeFeaturesPallas:
    """Pallas port of VTNet MergeFeatures.forward (only layers actually used)."""

    def __init__(self, img_res, key):
        self.res = int(img_res / 2 ** 4)
        d = 256 * self.res * self.res
        k1, k2 = jax.random.split(key)
        bound = 1.0 / math.sqrt(6.0)            # PyTorch Linear default, fan_in=6
        # PyTorch stores Linear weight as (out, in); kept as (in, out) here.
        self.w = jax.random.uniform(k1, (6, d), jnp.float32, -bound, bound)
        # Linear bias kept only for state-dict parity: under
        # BatchNorm1d(track_running_stats=False) it is algebraically cancelled
        # by the batch-mean subtraction, so it is never passed to the kernel.
        self.b = jax.random.uniform(k2, (1, d), jnp.float32, -bound, bound)
        self.gamma = jnp.ones((1, d), jnp.float32)    # BatchNorm affine defaults
        self.beta = jnp.zeros((1, d), jnp.float32)
        # NOTE: down1/down2/pool/dense/up1/up2 from __init__ are never used in
        # forward(), so they are intentionally not instantiated here.

    def __call__(self, x, feature, cloth_param, human_param):
        attribute = jnp.concatenate((cloth_param, human_param), axis=1)  # (B, 6)
        emb = fc_feature_pallas(attribute, self.w, self.gamma, self.beta)
        emb = emb.reshape(-1, 256, self.res, self.res)
        # TODO(synk): fuse this channel concat into the pallas_call by writing emb
        # at flat-column offset (Cx+Cf)*res*res of a (B, Ctot*res*res) output; left
        # in JAX because those offsets (64/192 here) are not 128-lane aligned and
        # unaligned lane-dim stores/concats are brittle to lower on Mosaic.
        return jnp.concatenate((x, feature, emb), axis=1)


def reference_forward(x, feature, cloth, human, w, b, gamma, beta, res):
    attr = jnp.concatenate((cloth, human), axis=1)
    z = attr @ w + b                     # bias included: must cancel under BN
    mean = z.mean(axis=0, keepdims=True)
    var = jnp.mean(jnp.square(z - mean), axis=0, keepdims=True)
    z = gamma * (z - mean) / jnp.sqrt(var + BN_EPS) + beta
    emb = z.reshape(-1, 256, res, res)
    return jnp.concatenate((x, feature, emb), axis=1)


if __name__ == "__main__":
    key = jax.random.PRNGKey(0)
    k_mod, k_x, k_f, k_c, k_h = jax.random.split(key, 5)

    img_res = 64                  # -> res = 4, D = 256*4*4 = 4096, grid = (1,)
    module = MergeFeaturesPallas(img_res, k_mod)
    res = module.res

    B, Cx, Cf = 2, 4, 8
    x = jax.random.normal(k_x, (B, Cx, res, res), jnp.float32)
    feature = jax.random.normal(k_f, (B, Cf, res, res), jnp.float32)
    cloth_param = jax.random.normal(k_c, (B, 3), jnp.float32)
    human_param = jax.random.normal(k_h, (B, 3), jnp.float32)

    out = module(x, feature, cloth_param, human_param)
    out = jax.block_until_ready(out)

    ref = reference_forward(x, feature, cloth_param, human_param,
                            module.w, module.b, module.gamma, module.beta, res)
    assert out.shape == (B, Cx + Cf + 256, res, res), out.shape
    assert jnp.allclose(out, ref, rtol=1e-4, atol=1e-4), "mismatch vs reference"

    print("KERNEL_OK")
</pallas_src>

<mosaic_0001>
module attributes {stable_mosaic.version = 11 : i64} {
  func.func @fc_bn_kernel(%arg0: i32, %arg1: memref<2x6xf32, #tpu.memory_space<vmem>>, %arg2: memref<6x4096xf32, #tpu.memory_space<vmem>>, %arg3: memref<1x4096xf32, #tpu.memory_space<vmem>>, %arg4: memref<1x4096xf32, #tpu.memory_space<vmem>>, %arg5: memref<2x4096xf32, #tpu.memory_space<vmem>>) attributes {dimension_semantics = [#tpu.dimension_semantics<parallel>], iteration_bounds = array<i64: 1>, scalar_prefetch = 0 : i64, scratch_operands = 0 : i64, tpu.core_type = #tpu.core_type<tc>, window_params = [{pipeline_mode = #tpu.pipeline_mode<synchronous>, transform_indices = @transform_0, window_bounds = array<i64: 2, 6>}, {transform_indices = @transform_1, window_bounds = array<i64: 6, 4096>}, {transform_indices = @transform_2, window_bounds = array<i64: 1, 4096>}, {transform_indices = @transform_3, window_bounds = array<i64: 1, 4096>}, {transform_indices = @transform_4, window_bounds = array<i64: 2, 4096>}]} {
    %c0 = arith.constant 0 : index
    %c0_0 = arith.constant 0 : index
    %0 = vector.load %arg1[%c0, %c0_0] : memref<2x6xf32, #tpu.memory_space<vmem>>, vector<2x6xf32>
    %c0_1 = arith.constant 0 : index
    %c0_2 = arith.constant 0 : index
    %1 = vector.load %arg2[%c0_1, %c0_2] : memref<6x4096xf32, #tpu.memory_space<vmem>>, vector<6x4096xf32>
    %2 = vector.extract_strided_slice %0 {offsets = [0, 0], sizes = [2, 1], strides = [1, 1]} : vector<2x6xf32> to vector<2x1xf32>
    %3 = vector.extract_strided_slice %1 {offsets = [0, 0], sizes = [1, 4096], strides = [1, 1]} : vector<6x4096xf32> to vector<1x4096xf32>
    %4 = vector.broadcast %2 : vector<2x1xf32> to vector<2x4096xf32>
    %5 = vector.broadcast %3 : vector<1x4096xf32> to vector<2x4096xf32>
    %6 = arith.mulf %4, %5 : vector<2x4096xf32>
    %7 = vector.extract_strided_slice %0 {offsets = [0, 1], sizes = [2, 1], strides = [1, 1]} : vector<2x6xf32> to vector<2x1xf32>
    %8 = vector.extract_strided_slice %1 {offsets = [1, 0], sizes = [1, 4096], strides = [1, 1]} : vector<6x4096xf32> to vector<1x4096xf32>
    %9 = vector.broadcast %7 : vector<2x1xf32> to vector<2x4096xf32>
    %10 = vector.broadcast %8 : vector<1x4096xf32> to vector<2x4096xf32>
    %11 = arith.mulf %9, %10 : vector<2x4096xf32>
    %12 = arith.addf %6, %11 : vector<2x4096xf32>
    %13 = vector.extract_strided_slice %0 {offsets = [0, 2], sizes = [2, 1], strides = [1, 1]} : vector<2x6xf32> to vector<2x1xf32>
    %14 = vector.extract_strided_slice %1 {offsets = [2, 0], sizes = [1, 4096], strides = [1, 1]} : vector<6x4096xf32> to vector<1x4096xf32>
    %15 = vector.broadcast %13 : vector<2x1xf32> to vector<2x4096xf32>
    %16 = vector.broadcast %14 : vector<1x4096xf32> to vector<2x4096xf32>
    %17 = arith.mulf %15, %16 : vector<2x4096xf32>
    %18 = arith.addf %12, %17 : vector<2x4096xf32>
    %19 = vector.extract_strided_slice %0 {offsets = [0, 3], sizes = [2, 1], strides = [1, 1]} : vector<2x6xf32> to vector<2x1xf32>
    %20 = vector.extract_strided_slice %1 {offsets = [3, 0], sizes = [1, 4096], strides = [1, 1]} : vector<6x4096xf32> to vector<1x4096xf32>
    %21 = vector.broadcast %19 : vector<2x1xf32> to vector<2x4096xf32>
    %22 = vector.broadcast %20 : vector<1x4096xf32> to vector<2x4096xf32>
    %23 = arith.mulf %21, %22 : vector<2x4096xf32>
    %24 = arith.addf %18, %23 : vector<2x4096xf32>
    %25 = vector.extract_strided_slice %0 {offsets = [0, 4], sizes = [2, 1], strides = [1, 1]} : vector<2x6xf32> to vector<2x1xf32>
    %26 = vector.extract_strided_slice %1 {offsets = [4, 0], sizes = [1, 4096], strides = [1, 1]} : vector<6x4096xf32> to vector<1x4096xf32>
    %27 = vector.broadcast %25 : vector<2x1xf32> to vector<2x4096xf32>
    %28 = vector.broadcast %26 : vector<1x4096xf32> to vector<2x4096xf32>
    %29 = arith.mulf %27, %28 : vector<2x4096xf32>
    %30 = arith.addf %24, %29 : vector<2x4096xf32>
    %31 = vector.extract_strided_slice %0 {offsets = [0, 5], sizes = [2, 1], strides = [1, 1]} : vector<2x6xf32> to vector<2x1xf32>
    %32 = vector.extract_strided_slice %1 {offsets = [5, 0], sizes = [1, 4096], strides = [1, 1]} : vector<6x4096xf32> to vector<1x4096xf32>
    %33 = vector.broadcast %31 : vector<2x1xf32> to vector<2x4096xf32>
    %34 = vector.broadcast %32 : vector<1x4096xf32> to vector<2x4096xf32>
    %35 = arith.mulf %33, %34 : vector<2x4096xf32>
    %36 = arith.addf %30, %35 : vector<2x4096xf32>
    %cst = arith.constant dense<0.000000e+00> : vector<4096xf32>
    %37 = vector.multi_reduction <add>, %36, %cst [0] : vector<2x4096xf32> to vector<4096xf32>
    %38 = vector.shape_cast %37 : vector<4096xf32> to vector<1x4096xf32>
    %cst_3 = arith.constant 2.000000e+00 : f32
    %39 = vector.broadcast %cst_3 : f32 to vector<1x4096xf32>
    %40 = arith.divf %38, %39 : vector<1x4096xf32>
    %41 = vector.broadcast %40 : vector<1x4096xf32> to vector<2x4096xf32>
    %42 = arith.subf %36, %41 : vector<2x4096xf32>
    %43 = arith.mulf %42, %42 : vector<2x4096xf32>
    %cst_4 = arith.constant dense<0.000000e+00> : vector<4096xf32>
    %44 = vector.multi_reduction <add>, %43, %cst_4 [0] : vector<2x4096xf32> to vector<4096xf32>
    %45 = vector.shape_cast %44 : vector<4096xf32> to vector<1x4096xf32>
    %cst_5 = arith.constant 2.000000e+00 : f32
    %46 = vector.broadcast %cst_5 : f32 to vector<1x4096xf32>
    %47 = arith.divf %45, %46 : vector<1x4096xf32>
    %c0_6 = arith.constant 0 : index
    %c0_7 = arith.constant 0 : index
    %48 = vector.load %arg3[%c0_6, %c0_7] : memref<1x4096xf32, #tpu.memory_space<vmem>>, vector<1x4096xf32>
    %cst_8 = arith.constant 9.99999974E-6 : f32
    %49 = vector.broadcast %cst_8 : f32 to vector<1x4096xf32>
    %50 = arith.addf %47, %49 : vector<1x4096xf32>
    %51 = math.rsqrt %50 : vector<1x4096xf32>
    %52 = arith.mulf %48, %51 : vector<1x4096xf32>
    %53 = vector.broadcast %52 : vector<1x4096xf32> to vector<2x4096xf32>
    %54 = arith.mulf %53, %42 : vector<2x4096xf32>
    %c0_9 = arith.constant 0 : index
    %c0_10 = arith.constant 0 : index
    %55 = vector.load %arg4[%c0_9, %c0_10] : memref<1x4096xf32, #tpu.memory_space<vmem>>, vector<1x4096xf32>
    %56 = vector.broadcast %55 : vector<1x4096xf32> to vector<2x4096xf32>
    %57 = arith.addf %54, %56 : vector<2x4096xf32>
    %c0_11 = arith.constant 0 : index
    %c0_12 = arith.constant 0 : index
    %58 = vector.load %arg5[%c0_11, %c0_12] : memref<2x4096xf32, #tpu.memory_space<vmem>>, vector<2x4096xf32>
    tpu.vector_store %arg5[%c0_11, %c0_12], %57 {strides = array<i32>} : memref<2x4096xf32, #tpu.memory_space<vmem>>, vector<2x4096xf32>,
    return
  }
  func.func @transform_0(%arg0: i32) -> (i32, i32) {
    %c0_i32 = arith.constant 0 : i32
    %c0_i32_0 = arith.constant 0 : i32
    %c0_i32_1 = arith.constant 0 : i32
    return %c0_i32, %c0_i32_0 : i32, i32
  }
  func.func @transform_1(%arg0: i32) -> (i32, i32) {
    %c0_i32 = arith.constant 0 : i32
    %c0_i32_0 = arith.constant 0 : i32
    return %c0_i32, %arg0 : i32, i32
  }
  func.func @transform_2(%arg0: i32) -> (i32, i32) {
    %c0_i32 = arith.constant 0 : i32
    %c0_i32_0 = arith.constant 0 : i32
    return %c0_i32, %arg0 : i32, i32
  }
  func.func @transform_3(%arg0: i32) -> (i32, i32) {
    %c0_i32 = arith.constant 0 : i32
    %c0_i32_0 = arith.constant 0 : i32
    return %c0_i32, %arg0 : i32, i32
  }
  func.func @transform_4(%arg0: i32) -> (i32, i32) {
    %c0_i32 = arith.constant 0 : i32
    %c0_i32_0 = arith.constant 0 : i32
    return %c0_i32, %arg0 : i32, i32
  }
}

</mosaic_0001>

<llo_original>
// kernel: tpu_custom_call.1
$region0: #{tpu_custom_call.1}
  #allocation0 [shape = 'u32[]', space=smem, size = 0x4, offset = 0x4, fixed_abs, tag = 'smem constant byte address 0x4 - core index']
  #allocation1 [shape = 'u32[72,128]{1,0:T(1,128)}', space=vmem, size = 0x9000, scoped, tag = 'internal scratch']
  %s0 = inlined_call_operand.hbm [shape: f32[2,6], index: 0, kind: input, shape index: {}]
  %s1 = inlined_call_operand.hbm [shape: f32[6,4096], index: 1, kind: input, shape index: {}]
  %s2 = inlined_call_operand.hbm [shape: f32[1,4096], index: 2, kind: input, shape index: {}]
  %s3 = inlined_call_operand.hbm [shape: f32[1,4096], index: 3, kind: input, shape index: {}]
  %s4 = inlined_call_operand.hbm [shape: f32[2,4096], index: 4, kind: output, shape index: {}]
  %s5 = sld [smem:[#allocation0]]
  $region42: #{tpu_custom_call.1} parent=0
    _
  %s7 = ssub.s32 1, %s5
  %s8 = scalar_select 0, %s7, %s5
  $region1: #{tpu_custom_call.1} parent=0
    #allocation2 [shape = 'u8[1024]{0}', space=vmem, size = 0x400, scoped, tag = 'input window, operand 0, single buffered']
    #allocation3 [shape = 's32[1]{0}', space=sflag, size = 0x4, scoped, tag = 'scoped memory for tpu_custom_call.1']
    #allocation4 [shape = 's32[1]{0}', space=sflag, size = 0x4, scoped, tag = 'scoped memory for tpu_custom_call.1']
    #allocation5 [shape = 'u8[131072]{0}', space=vmem, size = 0x20000, scoped, tag = 'input window, operand 1, single buffered']
    #allocation6 [shape = 's32[1]{0}', space=sflag, size = 0x4, scoped, tag = 'scoped memory for tpu_custom_call.1']
    #allocation7 [shape = 'u8[16384]{0}', space=vmem, size = 0x4000, scoped, tag = 'input window, operand 2, single buffered']
    #allocation8 [shape = 'u8[16384]{0}', space=vmem, size = 0x4000, scoped, tag = 'input window, operand 3, single buffered']
    #allocation9 [shape = 's32[1]{0}', space=sflag, size = 0x4, scoped, tag = 'scoped memory for tpu_custom_call.1']
    #allocation10 [shape = 'u8[32768]{0}', space=vmem, size = 0x8000, scoped, tag = 'output window, operand 0, single buffered']
    %9 = vsyncpa [#allocation3], 0
    %10 = vsyncpa [#allocation6], 0
    %11 = vsyncpa [#allocation9], 0
    %12 = vsyncpa [#allocation4], 0
    // Predicated region
    $region2: #{tpu_custom_call.1} parent=1 // pred_check
      _
    $region3: #{tpu_custom_call.1} parent=1 // pred_check_branch
      %14 = sbr.rel (0) target = $region5
    $region4: #{tpu_custom_call.1} parent=1 // pred_region
      %16 = vsyncadd [#allocation3], 0
      %s18 = sshll.u32 %s0, 4
      %s19 = int_to_ptr.hbm [resolvable:$true] %s18
      %s20 = sshll.u32 [#allocation2], 4
      %s21 = int_to_ptr.vmem [resolvable:$true] %s20
      %23 = dma.hbm_to_vmem [thread:$0]  %s19, 32, %s21, [#allocation3]
    $region5: #{tpu_custom_call.1} parent=1 // pred_fallthru
      _
    // Predicated region
    $region6: #{tpu_custom_call.1} parent=1 // pred_check
      _
    $region7: #{tpu_custom_call.1} parent=1 // pred_check_branch
      %25 = sbr.rel (0) target = $region9
    $region8: #{tpu_custom_call.1} parent=1 // pred_region
      %27 = vsyncadd [#allocation6], 0
      %s29 = sshll.u32 %s1, 4
      %s30 = int_to_ptr.hbm [resolvable:$true] %s29
      %s31 = sshll.u32 [#allocation5], 4
      %s32 = int_to_ptr.vmem [resolvable:$true] %s31
      %34 = dma.hbm_to_vmem [thread:$0]  %s30, 4096, %s32, [#allocation6]
    $region9: #{tpu_custom_call.1} parent=1 // pred_fallthru
      _
    // Predicated region
    $region10: #{tpu_custom_call.1} parent=1 // pred_check
      _
    $region11: #{tpu_custom_call.1} parent=1 // pred_check_branch
      %36 = sbr.rel (0) target = $region13
    $region12: #{tpu_custom_call.1} parent=1 // pred_region
      %38 = vsyncadd [#allocation6], 0
      %s40 = sshll.u32 %s2, 4
      %s41 = int_to_ptr.hbm [resolvable:$true] %s40
      %s42 = sshll.u32 [#allocation7], 4
      %s43 = int_to_ptr.vmem [resolvable:$true] %s42
      %45 = dma.hbm_to_vmem [thread:$0]  %s41, 512, %s43, [#allocation6]
    $region13: #{tpu_custom_call.1} parent=1 // pred_fallthru
      _
    // Predicated region
    $region14: #{tpu_custom_call.1} parent=1 // pred_check
      _
    $region15: #{tpu_custom_call.1} parent=1 // pred_check_branch
      %47 = sbr.rel (0) target = $region17
    $region16: #{tpu_custom_call.1} parent=1 // pred_region
      %49 = vsyncadd [#allocation9], 0
      %s51 = sshll.u32 %s3, 4
      %s52 = int_to_ptr.hbm [resolvable:$true] %s51
      %s53 = sshll.u32 [#allocation8], 4
      %s54 = int_to_ptr.vmem [resolvable:$true] %s53
      %56 = dma.hbm_to_vmem [thread:$0]  %s52, 512, %s54, [#allocation9]
    $region17: #{tpu_custom_call.1} parent=1 // pred_fallthru
      _
    // Predicated region
    $region18: #{tpu_custom_call.1} parent=1 // pred_check
      _
    $region19: #{tpu_custom_call.1} parent=1 // pred_check_branch
      %58 = sbr.rel (0) target = $region21
    $region20: #{tpu_custom_call.1} parent=1 // pred_region
      %60 = dma.done [#allocation3], 32
    $region21: #{tpu_custom_call.1} parent=1 // pred_fallthru
      _
    // Predicated region
    $region22: #{tpu_custom_call.1} parent=1 // pred_check
      _
    $region23: #{tpu_custom_call.1} parent=1 // pred_check_branch
      %62 = sbr.rel (0) target = $region25
    $region24: #{tpu_custom_call.1} parent=1 // pred_region
      %64 = dma.done [#allocation6], 4096
    $region25: #{tpu_custom_call.1} parent=1 // pred_fallthru
      _
    // Predicated region
    $region26: #{tpu_custom_call.1} parent=1 // pred_check
      _
    $region27: #{tpu_custom_call.1} parent=1 // pred_check_branch
      %66 = sbr.rel (0) target = $region29
    $region28: #{tpu_custom_call.1} parent=1 // pred_region
      %68 = dma.done [#allocation6], 512
    $region29: #{tpu_custom_call.1} parent=1 // pred_fallthru
      _
    // Predicated region
    $region30: #{tpu_custom_call.1} parent=1 // pred_check
      _
    $region31: #{tpu_custom_call.1} parent=1 // pred_check_branch
      %70 = sbr.rel (0) target = $region33
    $region32: #{tpu_custom_call.1} parent=1 // pred_region
      %72 = dma.done [#allocation9], 512
    $region33: #{tpu_custom_call.1} parent=1 // pred_fallthru
      _
    %v73 = vld [vmem:[#allocation2] sm:$0x3]
    %v74 = vld [vmem:[#allocation5] sm:$0x3f]
    %v75 = vld [vmem:[#allocation5 + $0x8] sm:$0x3f]
    %v76 = vld [vmem:[#allocation5 + $0x10] sm:$0x3f]
    %v77 = vld [vmem:[#allocation5 + $0x18] sm:$0x3f]
    %v78 = vld [vmem:[#allocation5 + $0x20] sm:$0x3f]
    %v79 = vld [vmem:[#allocation5 + $0x28] sm:$0x3f]
    %v80 = vld [vmem:[#allocation5 + $0x30] sm:$0x3f]
    %v81 = vld [vmem:[#allocation5 + $0x38] sm:$0x3f]
    %v82 = vld [vmem:[#allocation5 + $0x40] sm:$0x3f]
    %v83 = vld [vmem:[#allocation5 + $0x48] sm:$0x3f]
    %v84 = vld [vmem:[#allocation5 + $0x50] sm:$0x3f]
    %v85 = vld [vmem:[#allocation5 + $0x58] sm:$0x3f]
    %v86 = vld [vmem:[#allocation5 + $0x60] sm:$0x3f]
    %v87 = vld [vmem:[#allocation5 + $0x68] sm:$0x3f]
    %v88 = vld [vmem:[#allocation5 + $0x70] sm:$0x3f]
    %v89 = vld [vmem:[#allocation5 + $0x78] sm:$0x3f]
    %v90 = vld [vmem:[#allocation5 + $0x80] sm:$0x3f]
    %v91 = vld [vmem:[#allocation5 + $0x88] sm:$0x3f]
    %v92 = vld [vmem:[#allocation5 + $0x90] sm:$0x3f]
    %v93 = vld [vmem:[#allocation5 + $0x98] sm:$0x3f]
    %v94 = vld [vmem:[#allocation5 + $0xa0] sm:$0x3f]
    %v95 = vld [vmem:[#allocation5 + $0xa8] sm:$0x3f]
    %v96 = vld [vmem:[#allocation5 + $0xb0] sm:$0x3f]
    %v97 = vld [vmem:[#allocation5 + $0xb8] sm:$0x3f]
    %v98 = vld [vmem:[#allocation5 + $0xc0] sm:$0x3f]
    %v99 = vld [vmem:[#allocation5 + $0xc8] sm:$0x3f]
    %v100 = vld [vmem:[#allocation5 + $0xd0] sm:$0x3f]
    %v101 = vld [vmem:[#allocation5 + $0xd8] sm:$0x3f]
    %v102 = vld [vmem:[#allocation5 + $0xe0] sm:$0x3f]
    %v103 = vld [vmem:[#allocation5 + $0xe8] sm:$0x3f]
    %v104 = vld [vmem:[#allocation5 + $0xf0] sm:$0x3f]
    %v105 = vld [vmem:[#allocation5 + $0xf8] sm:$0x3f]
    %107 = vset.pattern.permute.xlu0 0
    %108 = vperm.xlu0 %107, %v73
    %v109 = vpop.permute.xlu0 %108
    %v111 = vperm.slane %v74, 0
    %v112 = vperm.slane %v75, 0
    %v113 = vperm.slane %v76, 0
    %v114 = vperm.slane %v77, 0
    %v115 = vperm.slane %v78, 0
    %v116 = vperm.slane %v79, 0
    %v117 = vperm.slane %v80, 0
    %v118 = vperm.slane %v81, 0
    %v119 = vperm.slane %v82, 0
    %v120 = vperm.slane %v83, 0
    %v121 = vperm.slane %v84, 0
    %v122 = vperm.slane %v85, 0
    %v123 = vperm.slane %v86, 0
    %v124 = vperm.slane %v87, 0
    %v125 = vperm.slane %v88, 0
    %v126 = vperm.slane %v89, 0
    %v127 = vperm.slane %v90, 0
    %v128 = vperm.slane %v91, 0
    %v129 = vperm.slane %v92, 0
    %v130 = vperm.slane %v93, 0
    %v131 = vperm.slane %v94, 0
    %v132 = vperm.slane %v95, 0
    %v133 = vperm.slane %v96, 0
    %v134 = vperm.slane %v97, 0
    %v135 = vperm.slane %v98, 0
    %v136 = vperm.slane %v99, 0
    %v137 = vperm.slane %v100, 0
    %v138 = vperm.slane %v101, 0
    %v139 = vperm.slane %v102, 0
    %v140 = vperm.slane %v103, 0
    %v141 = vperm.slane %v104, 0
    %v142 = vperm.slane %v105, 0
    %v143 = vmul.f32 %v109, %v111
    %v144 = vmul.f32 %v109, %v112
    %v145 = vmul.f32 %v109, %v113
    %v146 = vmul.f32 %v109, %v114
    %v147 = vmul.f32 %v109, %v115
    %v148 = vmul.f32 %v109, %v116
    %v149 = vmul.f32 %v109, %v117
    %v150 = vmul.f32 %v109, %v118
    %v151 = vmul.f32 %v109, %v119
    %v152 = vmul.f32 %v109, %v120
    %v153 = vmul.f32 %v109, %v121
    %v154 = vmul.f32 %v109, %v122
    %v155 = vmul.f32 %v109, %v123
    %v156 = vmul.f32 %v109, %v124
    %v157 = vmul.f32 %v109, %v125
    %v158 = vmul.f32 %v109, %v126
    %v159 = vmul.f32 %v109, %v127
    %v160 = vmul.f32 %v109, %v128
    %v161 = vmul.f32 %v109, %v129
    %v162 = vmul.f32 %v109, %v130
    %v163 = vmul.f32 %v109, %v131
    %v164 = vmul.f32 %v109, %v132
    %v165 = vmul.f32 %v109, %v133
    %v166 = vmul.f32 %v109, %v134
    %v167 = vmul.f32 %v109, %v135
    %v168 = vmul.f32 %v109, %v136
    %v169 = vmul.f32 %v109, %v137
    %v170 = vmul.f32 %v109, %v138
    %v171 = vmul.f32 %v109, %v139
    %v172 = vmul.f32 %v109, %v140
    %v173 = vmul.f32 %v109, %v141
    %v174 = vmul.f32 %v109, %v142
    %175 = vset.pattern.permute.xlu0 1
    %176 = vperm.xlu0 %175, %v73
    %v177 = vpop.permute.xlu0 %176
    %v179 = vperm.slane %v74, 1
    %v180 = vperm.slane %v75, 1
    %v181 = vperm.slane %v76, 1
    %v182 = vperm.slane %v77, 1
    %v183 = vperm.slane %v78, 1
    %v184 = vperm.slane %v79, 1
    %v185 = vperm.slane %v80, 1
    %v186 = vperm.slane %v81, 1
    %v187 = vperm.slane %v82, 1
    %v188 = vperm.slane %v83, 1
    %v189 = vperm.slane %v84, 1
    %v190 = vperm.slane %v85, 1
    %v191 = vperm.slane %v86, 1
    %v192 = vperm.slane %v87, 1
    %v193 = vperm.slane %v88, 1
    %v194 = vperm.slane %v89, 1
    %v195 = vperm.slane %v90, 1
    %v196 = vperm.slane %v91, 1
    %v197 = vperm.slane %v92, 1
    %v198 = vperm.slane %v93, 1
    %v199 = vperm.slane %v94, 1
    %v200 = vperm.slane %v95, 1
    %v201 = vperm.slane %v96, 1
    %v202 = vperm.slane %v97, 1
    %v203 = vperm.slane %v98, 1
    %v204 = vperm.slane %v99, 1
    %v205 = vperm.slane %v100, 1
    %v206 = vperm.slane %v101, 1
    %v207 = vperm.slane %v102, 1
    %v208 = vperm.slane %v103, 1
    %v209 = vperm.slane %v104, 1
    %v210 = vperm.slane %v105, 1
    %v211 = vmul.f32 %v177, %v179
    %v212 = vmul.f32 %v177, %v180
    %v213 = vmul.f32 %v177, %v181
    %v214 = vmul.f32 %v177, %v182
    %v215 = vmul.f32 %v177, %v183
    %v216 = vmul.f32 %v177, %v184
    %v217 = vmul.f32 %v177, %v185
    %v218 = vmul.f32 %v177, %v186
    %v219 = vmul.f32 %v177, %v187
    %v220 = vmul.f32 %v177, %v188
    %v221 = vmul.f32 %v177, %v189
    %v222 = vmul.f32 %v177, %v190
    %v223 = vmul.f32 %v177, %v191
    %v224 = vmul.f32 %v177, %v192
    %v225 = vmul.f32 %v177, %v193
    %v226 = vmul.f32 %v177, %v194
    %v227 = vmul.f32 %v177, %v195
    %v228 = vmul.f32 %v177, %v196
    %v229 = vmul.f32 %v177, %v197
    %v230 = vmul.f32 %v177, %v198
    %v231 = vmul.f32 %v177, %v199
    %v232 = vmul.f32 %v177, %v200
    %v233 = vmul.f32 %v177, %v201
    %v234 = vmul.f32 %v177, %v202
    %v235 = vmul.f32 %v177, %v203
    %v236 = vmul.f32 %v177, %v204
    %v237 = vmul.f32 %v177, %v205
    %v238 = vmul.f32 %v177, %v206
    %v239 = vmul.f32 %v177, %v207
    %v240 = vmul.f32 %v177, %v208
    %v241 = vmul.f32 %v177, %v209
    %v242 = vmul.f32 %v177, %v210
    %v243 = vadd.f32 %v143, %v211
    %v244 = vadd.f32 %v144, %v212
    %v245 = vadd.f32 %v145, %v213
    %v246 = vadd.f32 %v146, %v214
    %v247 = vadd.f32 %v147, %v215
    %v248 = vadd.f32 %v148, %v216
    %v249 = vadd.f32 %v149, %v217
    %v250 = vadd.f32 %v150, %v218
    %v251 = vadd.f32 %v151, %v219
    %v252 = vadd.f32 %v152, %v220
    %v253 = vadd.f32 %v153, %v221
    %v254 = vadd.f32 %v154, %v222
    %v255 = vadd.f32 %v155, %v223
    %v256 = vadd.f32 %v156, %v224
    %v257 = vadd.f32 %v157, %v225
    %v258 = vadd.f32 %v158, %v226
    %v259 = vadd.f32 %v159, %v227
    %v260 = vadd.f32 %v160, %v228
    %v261 = vadd.f32 %v161, %v229
    %v262 = vadd.f32 %v162, %v230
    %v263 = vadd.f32 %v163, %v231
    %v264 = vadd.f32 %v164, %v232
    %v265 = vadd.f32 %v165, %v233
    %v266 = vadd.f32 %v166, %v234
    %v267 = vadd.f32 %v167, %v235
    %v268 = vadd.f32 %v168, %v236
    %v269 = vadd.f32 %v169, %v237
    %v270 = vadd.f32 %v170, %v238
    %v271 = vadd.f32 %v171, %v239
    %v272 = vadd.f32 %v172, %v240
    %v273 = vadd.f32 %v173, %v241
    %v274 = vadd.f32 %v174, %v242
    %275 = vset.pattern.permute.xlu0 2
    %276 = vperm.xlu0 %275, %v73
    %v277 = vpop.permute.xlu0 %276
    %v279 = vperm.slane %v74, 2
    %v280 = vperm.slane %v75, 2
    %v281 = vperm.slane %v76, 2
    %v282 = vperm.slane %v77, 2
    %v283 = vperm.slane %v78, 2
    %v284 = vperm.slane %v79, 2
    %v285 = vperm.slane %v80, 2
    %v286 = vperm.slane %v81, 2
    %v287 = vperm.slane %v82, 2
    %v288 = vperm.slane %v83, 2
    %v289 = vperm.slane %v84, 2
    %v290 = vperm.slane %v85, 2
    %v291 = vperm.slane %v86, 2
    %v292 = vperm.slane %v87, 2
    %v293 = vperm.slane %v88, 2
    %v294 = vperm.slane %v89, 2
    %v295 = vperm.slane %v90, 2
    %v296 = vperm.slane %v91, 2
    %v297 = vperm.slane %v92, 2
    %v298 = vperm.slane %v93, 2
    %v299 = vperm.slane %v94, 2
    %v300 = vperm.slane %v95, 2
    %v301 = vperm.slane %v96, 2
    %v302 = vperm.slane %v97, 2
    %v303 = vperm.slane %v98, 2
    %v304 = vperm.slane %v99, 2
    %v305 = vperm.slane %v100, 2
    %v306 = vperm.slane %v101, 2
    %v307 = vperm.slane %v102, 2
    %v308 = vperm.slane %v103, 2
    %v309 = vperm.slane %v104, 2
    %v310 = vperm.slane %v105, 2
    %v311 = vmul.f32 %v277, %v279
    %v312 = vmul.f32 %v277, %v280
    %v313 = vmul.f32 %v277, %v281
    %v314 = vmul.f32 %v277, %v282
    %v315 = vmul.f32 %v277, %v283
    %v316 = vmul.f32 %v277, %v284
    %v317 = vmul.f32 %v277, %v285
    %v318 = vmul.f32 %v277, %v286
    %v319 = vmul.f32 %v277, %v287
    %v320 = vmul.f32 %v277, %v288
    %v321 = vmul.f32 %v277, %v289
    %v322 = vmul.f32 %v277, %v290
    %v323 = vmul.f32 %v277, %v291
    %v324 = vmul.f32 %v277, %v292
    %v325 = vmul.f32 %v277, %v293
    %v326 = vmul.f32 %v277, %v294
    %v327 = vmul.f32 %v277, %v295
    %v328 = vmul.f32 %v277, %v296
    %v329 = vmul.f32 %v277, %v297
    %v330 = vmul.f32 %v277, %v298
    %v331 = vmul.f32 %v277, %v299
    %v332 = vmul.f32 %v277, %v300
    %v333 = vmul.f32 %v277, %v301
    %v334 = vmul.f32 %v277, %v302
    %v335 = vmul.f32 %v277, %v303
    %v336 = vmul.f32 %v277, %v304
    %v337 = vmul.f32 %v277, %v305
    %v338 = vmul.f32 %v277, %v306
    %v339 = vmul.f32 %v277, %v307
    %v340 = vmul.f32 %v277, %v308
    %v341 = vmul.f32 %v277, %v309
    %v342 = vmul.f32 %v277, %v310
    %v343 = vadd.f32 %v243, %v311
    %v344 = vadd.f32 %v244, %v312
    %v345 = vadd.f32 %v245, %v313
    %v346 = vadd.f32 %v246, %v314
    %v347 = vadd.f32 %v247, %v315
    %v348 = vadd.f32 %v248, %v316
    %v349 = vadd.f32 %v249, %v317
    %v350 = vadd.f32 %v250, %v318
    %v351 = vadd.f32 %v251, %v319
    %v352 = vadd.f32 %v252, %v320
    %v353 = vadd.f32 %v253, %v321
    %v354 = vadd.f32 %v254, %v322
    %v355 = vadd.f32 %v255, %v323
    %v356 = vadd.f32 %v256, %v324
    %v357 = vadd.f32 %v257, %v325
    %v358 = vadd.f32 %v258, %v326
    %v359 = vadd.f32 %v259, %v327
    %v360 = vadd.f32 %v260, %v328
    %v361 = vadd.f32 %v261, %v329
    %v362 = vadd.f32 %v262, %v330
    %v363 = vadd.f32 %v263, %v331
    %v364 = vadd.f32 %v264, %v332
    %v365 = vadd.f32 %v265, %v333
    %v366 = vadd.f32 %v266, %v334
    %v367 = vadd.f32 %v267, %v335
    %v368 = vadd.f32 %v268, %v336
    %v369 = vadd.f32 %v269, %v337
    %v370 = vadd.f32 %v270, %v338
    %v371 = vadd.f32 %v271, %v339
    %v372 = vadd.f32 %v272, %v340
    %v373 = vadd.f32 %v273, %v341
    %v374 = vadd.f32 %v274, %v342
    %375 = vset.pattern.permute.xlu0 3
    %376 = vperm.xlu0 %375, %v73
    %v377 = vpop.permute.xlu0 %376
    %v379 = vperm.slane %v74, 3
    %v380 = vperm.slane %v75, 3
    %v381 = vperm.slane %v76, 3
    %v382 = vperm.slane %v77, 3
    %v383 = vperm.slane %v78, 3
    %v384 = vperm.slane %v79, 3
    %v385 = vperm.slane %v80, 3
    %v386 = vperm.slane %v81, 3
    %v387 = vperm.slane %v82, 3
    %v388 = vperm.slane %v83, 3
    %v389 = vperm.slane %v84, 3
    %v390 = vperm.slane %v85, 3
    %v391 = vperm.slane %v86, 3
    %v392 = vperm.slane %v87, 3
    %v393 = vperm.slane %v88, 3
    %v394 = vperm.slane %v89, 3
    %v395 = vperm.slane %v90, 3
    %v396 = vperm.slane %v91, 3
    %v397 = vperm.slane %v92, 3
    %v398 = vperm.slane %v93, 3
    %v399 = vperm.slane %v94, 3
    %v400 = vperm.slane %v95, 3
    %v401 = vperm.slane %v96, 3
    %v402 = vperm.slane %v97, 3
    %v403 = vperm.slane %v98, 3
    %v404 = vperm.slane %v99, 3
    %v405 = vperm.slane %v100, 3
    %v406 = vperm.slane %v101, 3
    %v407 = vperm.slane %v102, 3
    %v408 = vperm.slane %v103, 3
    %v409 = vperm.slane %v104, 3
    %v410 = vperm.slane %v105, 3
    %v411 = vmul.f32 %v377, %v379
    %v412 = vmul.f32 %v377, %v380
    %v413 = vmul.f32 %v377, %v381
    %v414 = vmul.f32 %v377, %v382
    %v415 = vmul.f32 %v377, %v383
    %v416 = vmul.f32 %v377, %v384
    %v417 = vmul.f32 %v377, %v385
    %v418 = vmul.f32 %v377, %v386
    %v419 = vmul.f32 %v377, %v387
    %v420 = vmul.f32 %v377, %v388
    %v421 = vmul.f32 %v377, %v389
    %v422 = vmul.f32 %v377, %v390
    %v423 = vmul.f32 %v377, %v391
    %v424 = vmul.f32 %v377, %v392
    %v425 = vmul.f32 %v377, %v393
    %v426 = vmul.f32 %v377, %v394
    %v427 = vmul.f32 %v377, %v395
    %v428 = vmul.f32 %v377, %v396
    %v429 = vmul.f32 %v377, %v397
    %v430 = vmul.f32 %v377, %v398
    %v431 = vmul.f32 %v377, %v399
    %v432 = vmul.f32 %v377, %v400
    %v433 = vmul.f32 %v377, %v401
    %v434 = vmul.f32 %v377, %v402
    %v435 = vmul.f32 %v377, %v403
    %v436 = vmul.f32 %v377, %v404
    %v437 = vmul.f32 %v377, %v405
    %v438 = vmul.f32 %v377, %v406
    %v439 = vmul.f32 %v377, %v407
    %v440 = vmul.f32 %v377, %v408
    %v441 = vmul.f32 %v377, %v409
    %v442 = vmul.f32 %v377, %v410
    %v443 = vadd.f32 %v343, %v411
    %v444 = vadd.f32 %v344, %v412
    %v445 = vadd.f32 %v345, %v413
    %v446 = vadd.f32 %v346, %v414
    %v447 = vadd.f32 %v347, %v415
    %v448 = vadd.f32 %v348, %v416
    %v449 = vadd.f32 %v349, %v417
    %v450 = vadd.f32 %v350, %v418
    %v451 = vadd.f32 %v351, %v419
    %v452 = vadd.f32 %v352, %v420
    %v453 = vadd.f32 %v353, %v421
    %v454 = vadd.f32 %v354, %v422
    %v455 = vadd.f32 %v355, %v423
    %v456 = vadd.f32 %v356, %v424
    %v457 = vadd.f32 %v357, %v425
    %v458 = vadd.f32 %v358, %v426
    %v459 = vadd.f32 %v359, %v427
    %v460 = vadd.f32 %v360, %v428
    %v461 = vadd.f32 %v361, %v429
    %v462 = vadd.f32 %v362, %v430
    %v463 = vadd.f32 %v363, %v431
    %v464 = vadd.f32 %v364, %v432
    %v465 = vadd.f32 %v365, %v433
    %v466 = vadd.f32 %v366, %v434
    %v467 = vadd.f32 %v367, %v435
    %v468 = vadd.f32 %v368, %v436
    %v469 = vadd.f32 %v369, %v437
    %v470 = vadd.f32 %v370, %v438
    %v471 = vadd.f32 %v371, %v439
    %v472 = vadd.f32 %v372, %v440
    %v473 = vadd.f32 %v373, %v441
    %v474 = vadd.f32 %v374, %v442
    %475 = vset.pattern.permute.xlu0 4
    %476 = vperm.xlu0 %475, %v73
    %v477 = vpop.permute.xlu0 %476
    %v479 = vperm.slane %v74, 4
    %v480 = vperm.slane %v75, 4
    %v481 = vperm.slane %v76, 4
    %v482 = vperm.slane %v77, 4
    %v483 = vperm.slane %v78, 4
    %v484 = vperm.slane %v79, 4
    %v485 = vperm.slane %v80, 4
    %v486 = vperm.slane %v81, 4
    %v487 = vperm.slane %v82, 4
    %v488 = vperm.slane %v83, 4
    %v489 = vperm.slane %v84, 4
    %v490 = vperm.slane %v85, 4
    %v491 = vperm.slane %v86, 4
    %v492 = vperm.slane %v87, 4
    %v493 = vperm.slane %v88, 4
    %v494 = vperm.slane %v89, 4
    %v495 = vperm.slane %v90, 4
    %v496 = vperm.slane %v91, 4
    %v497 = vperm.slane %v92, 4
    %v498 = vperm.slane %v93, 4
    %v499 = vperm.slane %v94, 4
    %v500 = vperm.slane %v95, 4
    %v501 = vperm.slane %v96, 4
    %v502 = vperm.slane %v97, 4
    %v503 = vperm.slane %v98, 4
    %v504 = vperm.slane %v99, 4
    %v505 = vperm.slane %v100, 4
    %v506 = vperm.slane %v101, 4
    %v507 = vperm.slane %v102, 4
    %v508 = vperm.slane %v103, 4
    %v509 = vperm.slane %v104, 4
    %v510 = vperm.slane %v105, 4
    %v511 = vmul.f32 %v477, %v479
    %v512 = vmul.f32 %v477, %v480
    %v513 = vmul.f32 %v477, %v481
    %v514 = vmul.f32 %v477, %v482
    %v515 = vmul.f32 %v477, %v483
    %v516 = vmul.f32 %v477, %v484
    %v517 = vmul.f32 %v477, %v485
    %v518 = vmul.f32 %v477, %v486
    %v519 = vmul.f32 %v477, %v487
    %v520 = vmul.f32 %v477, %v488
    %v521 = vmul.f32 %v477, %v489
    %v522 = vmul.f32 %v477, %v490
    %v523 = vmul.f32 %v477, %v491
    %v524 = vmul.f32 %v477, %v492
    %v525 = vmul.f32 %v477, %v493
    %v526 = vmul.f32 %v477, %v494
    %v527 = vmul.f32 %v477, %v495
    %v528 = vmul.f32 %v477, %v496
    %v529 = vmul.f32 %v477, %v497
    %v530 = vmul.f32 %v477, %v498
    %v531 = vmul.f32 %v477, %v499
    %v532 = vmul.f32 %v477, %v500
    %v533 = vmul.f32 %v477, %v501
    %v534 = vmul.f32 %v477, %v502
    %v535 = vmul.f32 %v477, %v503
    %v536 = vmul.f32 %v477, %v504
    %v537 = vmul.f32 %v477, %v505
    %v538 = vmul.f32 %v477, %v506
    %v539 = vmul.f32 %v477, %v507
    %v540 = vmul.f32 %v477, %v508
    %v541 = vmul.f32 %v477, %v509
    %v542 = vmul.f32 %v477, %v510
    %v543 = vadd.f32 %v443, %v511
    %v544 = vadd.f32 %v444, %v512
    %v545 = vadd.f32 %v445, %v513
    %v546 = vadd.f32 %v446, %v514
    %v547 = vadd.f32 %v447, %v515
    %v548 = vadd.f32 %v448, %v516
    %v549 = vadd.f32 %v449, %v517
    %v550 = vadd.f32 %v450, %v518
    %v551 = vadd.f32 %v451, %v519
    %v552 = vadd.f32 %v452, %v520
    %v553 = vadd.f32 %v453, %v521
    %v554 = vadd.f32 %v454, %v522
    %v555 = vadd.f32 %v455, %v523
    %v556 = vadd.f32 %v456, %v524
    %v557 = vadd.f32 %v457, %v525
    %v558 = vadd.f32 %v458, %v526
    %v559 = vadd.f32 %v459, %v527
    %v560 = vadd.f32 %v460, %v528
    %v561 = vadd.f32 %v461, %v529
    %v562 = vadd.f32 %v462, %v530
    %v563 = vadd.f32 %v463, %v531
    %v564 = vadd.f32 %v464, %v532
    %v565 = vadd.f32 %v465, %v533
    %v566 = vadd.f32 %v466, %v534
    %v567 = vadd.f32 %v467, %v535
    %v568 = vadd.f32 %v468, %v536
    %v569 = vadd.f32 %v469, %v537
    %v570 = vadd.f32 %v470, %v538
    %v571 = vadd.f32 %v471, %v539
    %v572 = vadd.f32 %v472, %v540
    %v573 = vadd.f32 %v473, %v541
    %v574 = vadd.f32 %v474, %v542
    %575 = vset.pattern.permute.xlu0 5
    %576 = vperm.xlu0 %575, %v73
    %v577 = vpop.permute.xlu0 %576
    %v579 = vperm.slane %v74, 5
    %v580 = vperm.slane %v75, 5
    %v581 = vperm.slane %v76, 5
    %v582 = vperm.slane %v77, 5
    %v583 = vperm.slane %v78, 5
    %v584 = vperm.slane %v79, 5
    %v585 = vperm.slane %v80, 5
    %v586 = vperm.slane %v81, 5
    %v587 = vperm.slane %v82, 5
    %v588 = vperm.slane %v83, 5
    %v589 = vperm.slane %v84, 5
    %v590 = vperm.slane %v85, 5
    %v591 = vperm.slane %v86, 5
    %v592 = vperm.slane %v87, 5
    %v593 = vperm.slane %v88, 5
    %v594 = vperm.slane %v89, 5
    %v595 = vperm.slane %v90, 5
    %v596 = vperm.slane %v91, 5
    %v597 = vperm.slane %v92, 5
    %v598 = vperm.slane %v93, 5
    %v599 = vperm.slane %v94, 5
    %v600 = vperm.slane %v95, 5
    %v601 = vperm.slane %v96, 5
    %v602 = vperm.slane %v97, 5
    %v603 = vperm.slane %v98, 5
    %v604 = vperm.slane %v99, 5
    %v605 = vperm.slane %v100, 5
    %v606 = vperm.slane %v101, 5
    %v607 = vperm.slane %v102, 5
    %v608 = vperm.slane %v103, 5
    %v609 = vperm.slane %v104, 5
    %v610 = vperm.slane %v105, 5
    %v611 = vmul.f32 %v577, %v579
    %v612 = vmul.f32 %v577, %v580
    %v613 = vmul.f32 %v577, %v581
    %v614 = vmul.f32 %v577, %v582
    %v615 = vmul.f32 %v577, %v583
    %v616 = vmul.f32 %v577, %v584
    %v617 = vmul.f32 %v577, %v585
    %v618 = vmul.f32 %v577, %v586
    %v619 = vmul.f32 %v577, %v587
    %v620 = vmul.f32 %v577, %v588
    %v621 = vmul.f32 %v577, %v589
    %v622 = vmul.f32 %v577, %v590
    %v623 = vmul.f32 %v577, %v591
    %v624 = vmul.f32 %v577, %v592
    %v625 = vmul.f32 %v577, %v593
    %v626 = vmul.f32 %v577, %v594
    %v627 = vmul.f32 %v577, %v595
    %v628 = vmul.f32 %v577, %v596
    %v629 = vmul.f32 %v577, %v597
    %v630 = vmul.f32 %v577, %v598
    %v631 = vmul.f32 %v577, %v599
    %v632 = vmul.f32 %v577, %v600
    %v633 = vmul.f32 %v577, %v601
    %v634 = vmul.f32 %v577, %v602
    %v635 = vmul.f32 %v577, %v603
    %v636 = vmul.f32 %v577, %v604
    %v637 = vmul.f32 %v577, %v605
    %v638 = vmul.f32 %v577, %v606
    %v639 = vmul.f32 %v577, %v607
    %v640 = vmul.f32 %v577, %v608
    %v641 = vmul.f32 %v577, %v609
    %v642 = vmul.f32 %v577, %v610
    %v643 = vadd.f32 %v543, %v611
    %v644 = vadd.f32 %v544, %v612
    %v645 = vadd.f32 %v545, %v613
    %v646 = vadd.f32 %v546, %v614
    %v647 = vadd.f32 %v547, %v615
    %v648 = vadd.f32 %v548, %v616
    %v649 = vadd.f32 %v549, %v617
    %v650 = vadd.f32 %v550, %v618
    %v651 = vadd.f32 %v551, %v619
    %v652 = vadd.f32 %v552, %v620
    %v653 = vadd.f32 %v553, %v621
    %v654 = vadd.f32 %v554, %v622
    %v655 = vadd.f32 %v555, %v623
    %v656 = vadd.f32 %v556, %v624
    %v657 = vadd.f32 %v557, %v625
    %v658 = vadd.f32 %v558, %v626
    %v659 = vadd.f32 %v559, %v627
    %v660 = vadd.f32 %v560, %v628
    %v661 = vadd.f32 %v561, %v629
    %v662 = vadd.f32 %v562, %v630
    %v663 = vadd.f32 %v563, %v631
    %v664 = vadd.f32 %v564, %v632
    %v665 = vadd.f32 %v565, %v633
    %v666 = vadd.f32 %v566, %v634
    %v667 = vadd.f32 %v567, %v635
    %v668 = vadd.f32 %v568, %v636
    %v669 = vadd.f32 %v569, %v637
    %v670 = vadd.f32 %v570, %v638
    %v671 = vadd.f32 %v571, %v639
    %v672 = vadd.f32 %v572, %v640
    %v673 = vadd.f32 %v573, %v641
    %v674 = vadd.f32 %v574, %v642
    %vm675 = vcmask 1041408
    %v676 = vsel %vm675, %v643, 0.0
    %v677 = vrot.slane %v676, 4
    %v678 = vadd.f32 %v676, %v677
    %v679 = vrot.slane %v678, 2
    %v680 = vadd.f32 %v678, %v679
    %v681 = vrot.slane %v680, 1
    %v682 = vadd.f32 %v680, %v681
    %v683 = vsel %vm675, %v644, 0.0
    %v684 = vrot.slane %v683, 4
    %v685 = vadd.f32 %v683, %v684
    %v686 = vrot.slane %v685, 2
    %v687 = vadd.f32 %v685, %v686
    %v688 = vrot.slane %v687, 1
    %v689 = vadd.f32 %v687, %v688
    %v690 = vsel %vm675, %v645, 0.0
    %v691 = vrot.slane %v690, 4
    %v692 = vadd.f32 %v690, %v691
    %v693 = vrot.slane %v692, 2
    %v694 = vadd.f32 %v692, %v693
    %v695 = vrot.slane %v694, 1
    %v696 = vadd.f32 %v694, %v695
    %v697 = vsel %vm675, %v646, 0.0
    %v698 = vrot.slane %v697, 4
    %v699 = vadd.f32 %v697, %v698
    %v700 = vrot.slane %v699, 2
    %v701 = vadd.f32 %v699, %v700
    %v702 = vrot.slane %v701, 1
    %v703 = vadd.f32 %v701, %v702
    %v704 = vsel %vm675, %v647, 0.0
    %v705 = vrot.slane %v704, 4
    %v706 = vadd.f32 %v704, %v705
    %v707 = vrot.slane %v706, 2
    %v708 = vadd.f32 %v706, %v707
    %v709 = vrot.slane %v708, 1
    %v710 = vadd.f32 %v708, %v709
    %v711 = vsel %vm675, %v648, 0.0
    %v712 = vrot.slane %v711, 4
    %v713 = vadd.f32 %v711, %v712
    %v714 = vrot.slane %v713, 2
    %v715 = vadd.f32 %v713, %v714
    %v716 = vrot.slane %v715, 1
    %v717 = vadd.f32 %v715, %v716
    %v718 = vsel %vm675, %v649, 0.0
    %v719 = vrot.slane %v718, 4
    %v720 = vadd.f32 %v718, %v719
    %v721 = vrot.slane %v720, 2
    %v722 = vadd.f32 %v720, %v721
    %v723 = vrot.slane %v722, 1
    %v724 = vadd.f32 %v722, %v723
    %v725 = vsel %vm675, %v650, 0.0
    %v726 = vrot.slane %v725, 4
    %v727 = vadd.f32 %v725, %v726
    %v728 = vrot.slane %v727, 2
    %v729 = vadd.f32 %v727, %v728
    %v730 = vrot.slane %v729, 1
    %v731 = vadd.f32 %v729, %v730
    %v732 = vsel %vm675, %v651, 0.0
    %v733 = vrot.slane %v732, 4
    %v734 = vadd.f32 %v732, %v733
    %v735 = vrot.slane %v734, 2
    %v736 = vadd.f32 %v734, %v735
    %v737 = vrot.slane %v736, 1
    %v738 = vadd.f32 %v736, %v737
    %v739 = vsel %vm675, %v652, 0.0
    %v740 = vrot.slane %v739, 4
    %v741 = vadd.f32 %v739, %v740
    %v742 = vrot.slane %v741, 2
    %v743 = vadd.f32 %v741, %v742
    %v744 = vrot.slane %v743, 1
    %v745 = vadd.f32 %v743, %v744
    %v746 = vsel %vm675, %v653, 0.0
    %v747 = vrot.slane %v746, 4
    %v748 = vadd.f32 %v746, %v747
    %v749 = vrot.slane %v748, 2
    %v750 = vadd.f32 %v748, %v749
    %v751 = vrot.slane %v750, 1
    %v752 = vadd.f32 %v750, %v751
    %v753 = vsel %vm675, %v654, 0.0
    %v754 = vrot.slane %v753, 4
    %v755 = vadd.f32 %v753, %v754
    %v756 = vrot.slane %v755, 2
    %v757 = vadd.f32 %v755, %v756
    %v758 = vrot.slane %v757, 1
    %v759 = vadd.f32 %v757, %v758
    %v760 = vsel %vm675, %v655, 0.0
    %v761 = vrot.slane %v760, 4
    %v762 = vadd.f32 %v760, %v761
    %v763 = vrot.slane %v762, 2
    %v764 = vadd.f32 %v762, %v763
    %v765 = vrot.slane %v764, 1
    %v766 = vadd.f32 %v764, %v765
    %v767 = vsel %vm675, %v656, 0.0
    %v768 = vrot.slane %v767, 4
    %v769 = vadd.f32 %v767, %v768
    %v770 = vrot.slane %v769, 2
    %v771 = vadd.f32 %v769, %v770
    %v772 = vrot.slane %v771, 1
    %v773 = vadd.f32 %v771, %v772
    %v774 = vsel %vm675, %v657, 0.0
    %v775 = vrot.slane %v774, 4
    %v776 = vadd.f32 %v774, %v775
    %v777 = vrot.slane %v776, 2
    %v778 = vadd.f32 %v776, %v777
    %v779 = vrot.slane %v778, 1
    %v780 = vadd.f32 %v778, %v779
    %v781 = vsel %vm675, %v658, 0.0
    %v782 = vrot.slane %v781, 4
    %v783 = vadd.f32 %v781, %v782
    %v784 = vrot.slane %v783, 2
    %v785 = vadd.f32 %v783, %v784
    %v786 = vrot.slane %v785, 1
    %v787 = vadd.f32 %v785, %v786
    %v788 = vsel %vm675, %v659, 0.0
    %v789 = vrot.slane %v788, 4
    %v790 = vadd.f32 %v788, %v789
    %v791 = vrot.slane %v790, 2
    %v792 = vadd.f32 %v790, %v791
    %v793 = vrot.slane %v792, 1
    %v794 = vadd.f32 %v792, %v793
    %v795 = vsel %vm675, %v660, 0.0
    %v796 = vrot.slane %v795, 4
    %v797 = vadd.f32 %v795, %v796
    %v798 = vrot.slane %v797, 2
    %v799 = vadd.f32 %v797, %v798
    %v800 = vrot.slane %v799, 1
    %v801 = vadd.f32 %v799, %v800
    %v802 = vsel %vm675, %v661, 0.0
    %v803 = vrot.slane %v802, 4
    %v804 = vadd.f32 %v802, %v803
    %v805 = vrot.slane %v804, 2
    %v806 = vadd.f32 %v804, %v805
    %v807 = vrot.slane %v806, 1
    %v808 = vadd.f32 %v806, %v807
    %v809 = vsel %vm675, %v662, 0.0
    %v810 = vrot.slane %v809, 4
    %v811 = vadd.f32 %v809, %v810
    %v812 = vrot.slane %v811, 2
    %v813 = vadd.f32 %v811, %v812
    %v814 = vrot.slane %v813, 1
    %v815 = vadd.f32 %v813, %v814
    %v816 = vsel %vm675, %v663, 0.0
    %v817 = vrot.slane %v816, 4
    %v818 = vadd.f32 %v816, %v817
    %v819 = vrot.slane %v818, 2
    %v820 = vadd.f32 %v818, %v819
    %v821 = vrot.slane %v820, 1
    %v822 = vadd.f32 %v820, %v821
    %v823 = vsel %vm675, %v664, 0.0
    %v824 = vrot.slane %v823, 4
    %v825 = vadd.f32 %v823, %v824
    %v826 = vrot.slane %v825, 2
    %v827 = vadd.f32 %v825, %v826
    %v828 = vrot.slane %v827, 1
    %v829 = vadd.f32 %v827, %v828
    %v830 = vsel %vm675, %v665, 0.0
    %v831 = vrot.slane %v830, 4
    %v832 = vadd.f32 %v830, %v831
    %v833 = vrot.slane %v832, 2
    %v834 = vadd.f32 %v832, %v833
    %v835 = vrot.slane %v834, 1
    %v836 = vadd.f32 %v834, %v835
    %v837 = vsel %vm675, %v666, 0.0
    %v838 = vrot.slane %v837, 4
    %v839 = vadd.f32 %v837, %v838
    %v840 = vrot.slane %v839, 2
    %v841 = vadd.f32 %v839, %v840
    %v842 = vrot.slane %v841, 1
    %v843 = vadd.f32 %v841, %v842
    %v844 = vsel %vm675, %v667, 0.0
    %v845 = vrot.slane %v844, 4
    %v846 = vadd.f32 %v844, %v845
    %v847 = vrot.slane %v846, 2
    %v848 = vadd.f32 %v846, %v847
    %v849 = vrot.slane %v848, 1
    %v850 = vadd.f32 %v848, %v849
    %v851 = vsel %vm675, %v668, 0.0
    %v852 = vrot.slane %v851, 4
    %v853 = vadd.f32 %v851, %v852
    %v854 = vrot.slane %v853, 2
    %v855 = vadd.f32 %v853, %v854
    %v856 = vrot.slane %v855, 1
    %v857 = vadd.f32 %v855, %v856
    %v858 = vsel %vm675, %v669, 0.0
    %v859 = vrot.slane %v858, 4
    %v860 = vadd.f32 %v858, %v859
    %v861 = vrot.slane %v860, 2
    %v862 = vadd.f32 %v860, %v861
    %v863 = vrot.slane %v862, 1
    %v864 = vadd.f32 %v862, %v863
    %v865 = vsel %vm675, %v670, 0.0
    %v866 = vrot.slane %v865, 4
    %v867 = vadd.f32 %v865, %v866
    %v868 = vrot.slane %v867, 2
    %v869 = vadd.f32 %v867, %v868
    %v870 = vrot.slane %v869, 1
    %v871 = vadd.f32 %v869, %v870
    %v872 = vsel %vm675, %v671, 0.0
    %v873 = vrot.slane %v872, 4
    %v874 = vadd.f32 %v872, %v873
    %v875 = vrot.slane %v874, 2
    %v876 = vadd.f32 %v874, %v875
    %v877 = vrot.slane %v876, 1
    %v878 = vadd.f32 %v876, %v877
    %v879 = vsel %vm675, %v672, 0.0
    %v880 = vrot.slane %v879, 4
    %v881 = vadd.f32 %v879, %v880
    %v882 = vrot.slane %v881, 2
    %v883 = vadd.f32 %v881, %v882
    %v884 = vrot.slane %v883, 1
    %v885 = vadd.f32 %v883, %v884
    %v886 = vsel %vm675, %v673, 0.0
    %v887 = vrot.slane %v886, 4
    %v888 = vadd.f32 %v886, %v887
    %v889 = vrot.slane %v888, 2
    %v890 = vadd.f32 %v888, %v889
    %v891 = vrot.slane %v890, 1
    %v892 = vadd.f32 %v890, %v891
    %v893 = vsel %vm675, %v674, 0.0
    %v894 = vrot.slane %v893, 4
    %v895 = vadd.f32 %v893, %v894
    %v896 = vrot.slane %v895, 2
    %v897 = vadd.f32 %v895, %v896
    %v898 = vrot.slane %v897, 1
    %v899 = vadd.f32 %v897, %v898
    %v900 = vrcp.pop 2.0
    %v901 = vmul.f32 2.0, %v900
    %v902 = vsub.f32 1.0, %v901
    %v903 = vmul.f32 %v900, %v902
    %v904 = vadd.f32 %v900, %v903
    %vm905 = vweird.f32 %v900
    %v906 = vsel %vm905, %v900, %v904
    %v907 = vmul.f32 %v682, %v906
    %v908 = vmul.f32 %v689, %v906
    %v909 = vmul.f32 %v696, %v906
    %v910 = vmul.f32 %v703, %v906
    %v911 = vmul.f32 %v710, %v906
    %v912 = vmul.f32 %v717, %v906
    %v913 = vmul.f32 %v724, %v906
    %v914 = vmul.f32 %v731, %v906
    %v915 = vmul.f32 %v738, %v906
    %v916 = vmul.f32 %v745, %v906
    %v917 = vmul.f32 %v752, %v906
    %v918 = vmul.f32 %v759, %v906
    %v919 = vmul.f32 %v766, %v906
    %v920 = vmul.f32 %v773, %v906
    %v921 = vmul.f32 %v780, %v906
    %v922 = vmul.f32 %v787, %v906
    %v923 = vmul.f32 %v794, %v906
    %v924 = vmul.f32 %v801, %v906
    %v925 = vmul.f32 %v808, %v906
    %v926 = vmul.f32 %v815, %v906
    %v927 = vmul.f32 %v822, %v906
    %v928 = vmul.f32 %v829, %v906
    %v929 = vmul.f32 %v836, %v906
    %v930 = vmul.f32 %v843, %v906
    %v931 = vmul.f32 %v850, %v906
    %v932 = vmul.f32 %v857, %v906
    %v933 = vmul.f32 %v864, %v906
    %v934 = vmul.f32 %v871, %v906
    %v935 = vmul.f32 %v878, %v906
    %v936 = vmul.f32 %v885, %v906
    %v937 = vmul.f32 %v892, %v906
    %v938 = vmul.f32 %v899, %v906
    %v939 = vsub.f32 %v643, %v907
    %v940 = vsub.f32 %v644, %v908
    %v941 = vsub.f32 %v645, %v909
    %v942 = vsub.f32 %v646, %v910
    %v943 = vsub.f32 %v647, %v911
    %v944 = vsub.f32 %v648, %v912
    %v945 = vsub.f32 %v649, %v913
    %v946 = vsub.f32 %v650, %v914
    %v947 = vsub.f32 %v651, %v915
    %v948 = vsub.f32 %v652, %v916
    %v949 = vsub.f32 %v653, %v917
    %v950 = vsub.f32 %v654, %v918
    %v951 = vsub.f32 %v655, %v919
    %v952 = vsub.f32 %v656, %v920
    %v953 = vsub.f32 %v657, %v921
    %v954 = vsub.f32 %v658, %v922
    %v955 = vsub.f32 %v659, %v923
    %v956 = vsub.f32 %v660, %v924
    %v957 = vsub.f32 %v661, %v925
    %v958 = vsub.f32 %v662, %v926
    %v959 = vsub.f32 %v663, %v927
    %v960 = vsub.f32 %v664, %v928
    %v961 = vsub.f32 %v665, %v929
    %v962 = vsub.f32 %v666, %v930
    %v963 = vsub.f32 %v667, %v931
    %v964 = vsub.f32 %v668, %v932
    %v965 = vsub.f32 %v669, %v933
    %v966 = vsub.f32 %v670, %v934
    %v967 = vsub.f32 %v671, %v935
    %v968 = vsub.f32 %v672, %v936
    %v969 = vsub.f32 %v673, %v937
    %v970 = vsub.f32 %v674, %v938
    %v971 = vmul.f32 %v939, %v939
    %v972 = vmul.f32 %v940, %v940
    %v973 = vmul.f32 %v941, %v941
    %v974 = vmul.f32 %v942, %v942
    %v975 = vmul.f32 %v943, %v943
    %v976 = vmul.f32 %v944, %v944
    %v977 = vmul.f32 %v945, %v945
    %v978 = vmul.f32 %v946, %v946
    %v979 = vmul.f32 %v947, %v947
    %v980 = vmul.f32 %v948, %v948
    %v981 = vmul.f32 %v949, %v949
    %v982 = vmul.f32 %v950, %v950
    %v983 = vmul.f32 %v951, %v951
    %v984 = vmul.f32 %v952, %v952
    %v985 = vmul.f32 %v953, %v953
    %v986 = vmul.f32 %v954, %v954
    %v987 = vmul.f32 %v955, %v955
    %v988 = vmul.f32 %v956, %v956
    %v989 = vmul.f32 %v957, %v957
    %v990 = vmul.f32 %v958, %v958
    %v991 = vmul.f32 %v959, %v959
    %v992 = vmul.f32 %v960, %v960
    %v993 = vmul.f32 %v961, %v961
    %v994 = vmul.f32 %v962, %v962
    %v995 = vmul.f32 %v963, %v963
    %v996 = vmul.f32 %v964, %v964
    %v997 = vmul.f32 %v965, %v965
    %v998 = vmul.f32 %v966, %v966
    %v999 = vmul.f32 %v967, %v967
    %v1000 = vmul.f32 %v968, %v968
    %v1001 = vmul.f32 %v969, %v969
    %v1002 = vmul.f32 %v970, %v970
    %v1003 = vsel %vm675, %v971, 0.0
    %v1004 = vrot.slane %v1003, 4
    %v1005 = vadd.f32 %v1003, %v1004
    %v1006 = vrot.slane %v1005, 2
    %v1007 = vadd.f32 %v1005, %v1006
    %v1008 = vrot.slane %v1007, 1
    %v1009 = vadd.f32 %v1007, %v1008
    %v1010 = vsel %vm675, %v972, 0.0
    %v1011 = vrot.slane %v1010, 4
    %v1012 = vadd.f32 %v1010, %v1011
    %v1013 = vrot.slane %v1012, 2
    %v1014 = vadd.f32 %v1012, %v1013
    %v1015 = vrot.slane %v1014, 1
    %v1016 = vadd.f32 %v1014, %v1015
    %v1017 = vsel %vm675, %v973, 0.0
    %v1018 = vrot.slane %v1017, 4
    %v1019 = vadd.f32 %v1017, %v1018
    %v1020 = vrot.slane %v1019, 2
    %v1021 = vadd.f32 %v1019, %v1020
    %v1022 = vrot.slane %v1021, 1
    %v1023 = vadd.f32 %v1021, %v1022
    %v1024 = vsel %vm675, %v974, 0.0
    %v1025 = vrot.slane %v1024, 4
    %v1026 = vadd.f32 %v1024, %v1025
    %v1027 = vrot.slane %v1026, 2
    %v1028 = vadd.f32 %v1026, %v1027
    %v1029 = vrot.slane %v1028, 1
    %v1030 = vadd.f32 %v1028, %v1029
    %v1031 = vsel %vm675, %v975, 0.0
    %v1032 = vrot.slane %v1031, 4
    %v1033 = vadd.f32 %v1031, %v1032
    %v1034 = vrot.slane %v1033, 2
    %v1035 = vadd.f32 %v1033, %v1034
    %v1036 = vrot.slane %v1035, 1
    %v1037 = vadd.f32 %v1035, %v1036
    %v1038 = vsel %vm675, %v976, 0.0
    %v1039 = vrot.slane %v1038, 4
    %v1040 = vadd.f32 %v1038, %v1039
    %v1041 = vrot.slane %v1040, 2
    %v1042 = vadd.f32 %v1040, %v1041
    %v1043 = vrot.slane %v1042, 1
    %v1044 = vadd.f32 %v1042, %v1043
    %v1045 = vsel %vm675, %v977, 0.0
    %v1046 = vrot.slane %v1045, 4
    %v1047 = vadd.f32 %v1045, %v1046
    %v1048 = vrot.slane %v1047, 2
    %v1049 = vadd.f32 %v1047, %v1048
    %v1050 = vrot.slane %v1049, 1
    %v1051 = vadd.f32 %v1049, %v1050
    %v1052 = vsel %vm675, %v978, 0.0
    %v1053 = vrot.slane %v1052, 4
    %v1054 = vadd.f32 %v1052, %v1053
    %v1055 = vrot.slane %v1054, 2
    %v1056 = vadd.f32 %v1054, %v1055
    %v1057 = vrot.slane %v1056, 1
    %v1058 = vadd.f32 %v1056, %v1057
    %v1059 = vsel %vm675, %v979, 0.0
    %v1060 = vrot.slane %v1059, 4
    %v1061 = vadd.f32 %v1059, %v1060
    %v1062 = vrot.slane %v1061, 2
    %v1063 = vadd.f32 %v1061, %v1062
    %v1064 = vrot.slane %v1063, 1
    %v1065 = vadd.f32 %v1063, %v1064
    %v1066 = vsel %vm675, %v980, 0.0
    %v1067 = vrot.slane %v1066, 4
    %v1068 = vadd.f32 %v1066, %v1067
    %v1069 = vrot.slane %v1068, 2
    %v1070 = vadd.f32 %v1068, %v1069
    %v1071 = vrot.slane %v1070, 1
    %v1072 = vadd.f32 %v1070, %v1071
    %v1073 = vsel %vm675, %v981, 0.0
    %v1074 = vrot.slane %v1073, 4
    %v1075 = vadd.f32 %v1073, %v1074
    %v1076 = vrot.slane %v1075, 2
    %v1077 = vadd.f32 %v1075, %v1076
    %v1078 = vrot.slane %v1077, 1
    %v1079 = vadd.f32 %v1077, %v1078
    %v1080 = vsel %vm675, %v982, 0.0
    %v1081 = vrot.slane %v1080, 4
    %v1082 = vadd.f32 %v1080, %v1081
    %v1083 = vrot.slane %v1082, 2
    %v1084 = vadd.f32 %v1082, %v1083
    %v1085 = vrot.slane %v1084, 1
    %v1086 = vadd.f32 %v1084, %v1085
    %v1087 = vsel %vm675, %v983, 0.0
    %v1088 = vrot.slane %v1087, 4
    %v1089 = vadd.f32 %v1087, %v1088
    %v1090 = vrot.slane %v1089, 2
    %v1091 = vadd.f32 %v1089, %v1090
    %v1092 = vrot.slane %v1091, 1
    %v1093 = vadd.f32 %v1091, %v1092
    %v1094 = vsel %vm675, %v984, 0.0
    %v1095 = vrot.slane %v1094, 4
    %v1096 = vadd.f32 %v1094, %v1095
    %v1097 = vrot.slane %v1096, 2
    %v1098 = vadd.f32 %v1096, %v1097
    %v1099 = vrot.slane %v1098, 1
    %v1100 = vadd.f32 %v1098, %v1099
    %v1101 = vsel %vm675, %v985, 0.0
    %v1102 = vrot.slane %v1101, 4
    %v1103 = vadd.f32 %v1101, %v1102
    %v1104 = vrot.slane %v1103, 2
    %v1105 = vadd.f32 %v1103, %v1104
    %v1106 = vrot.slane %v1105, 1
    %v1107 = vadd.f32 %v1105, %v1106
    %v1108 = vsel %vm675, %v986, 0.0
    %v1109 = vrot.slane %v1108, 4
    %v1110 = vadd.f32 %v1108, %v1109
    %v1111 = vrot.slane %v1110, 2
    %v1112 = vadd.f32 %v1110, %v1111
    %v1113 = vrot.slane %v1112, 1
    %v1114 = vadd.f32 %v1112, %v1113
    %v1115 = vsel %vm675, %v987, 0.0
    %v1116 = vrot.slane %v1115, 4
    %v1117 = vadd.f32 %v1115, %v1116
    %v1118 = vrot.slane %v1117, 2
    %v1119 = vadd.f32 %v1117, %v1118
    %v1120 = vrot.slane %v1119, 1
    %v1121 = vadd.f32 %v1119, %v1120
    %v1122 = vsel %vm675, %v988, 0.0
    %v1123 = vrot.slane %v1122, 4
    %v1124 = vadd.f32 %v1122, %v1123
    %v1125 = vrot.slane %v1124, 2
    %v1126 = vadd.f32 %v1124, %v1125
    %v1127 = vrot.slane %v1126, 1
    %v1128 = vadd.f32 %v1126, %v1127
    %v1129 = vsel %vm675, %v989, 0.0
    %v1130 = vrot.slane %v1129, 4
    %v1131 = vadd.f32 %v1129, %v1130
    %v1132 = vrot.slane %v1131, 2
    %v1133 = vadd.f32 %v1131, %v1132
    %v1134 = vrot.slane %v1133, 1
    %v1135 = vadd.f32 %v1133, %v1134
    %v1136 = vsel %vm675, %v990, 0.0
    %v1137 = vrot.slane %v1136, 4
    %v1138 = vadd.f32 %v1136, %v1137
    %v1139 = vrot.slane %v1138, 2
    %v1140 = vadd.f32 %v1138, %v1139
    %v1141 = vrot.slane %v1140, 1
    %v1142 = vadd.f32 %v1140, %v1141
    %v1143 = vsel %vm675, %v991, 0.0
    %v1144 = vrot.slane %v1143, 4
    %v1145 = vadd.f32 %v1143, %v1144
    %v1146 = vrot.slane %v1145, 2
    %v1147 = vadd.f32 %v1145, %v1146
    %v1148 = vrot.slane %v1147, 1
    %v1149 = vadd.f32 %v1147, %v1148
    %v1150 = vsel %vm675, %v992, 0.0
    %v1151 = vrot.slane %v1150, 4
    %v1152 = vadd.f32 %v1150, %v1151
    %v1153 = vrot.slane %v1152, 2
    %v1154 = vadd.f32 %v1152, %v1153
    %v1155 = vrot.slane %v1154, 1
    %v1156 = vadd.f32 %v1154, %v1155
    %v1157 = vsel %vm675, %v993, 0.0
    %v1158 = vrot.slane %v1157, 4
    %v1159 = vadd.f32 %v1157, %v1158
    %v1160 = vrot.slane %v1159, 2
    %v1161 = vadd.f32 %v1159, %v1160
    %v1162 = vrot.slane %v1161, 1
    %v1163 = vadd.f32 %v1161, %v1162
    %v1164 = vsel %vm675, %v994, 0.0
    %v1165 = vrot.slane %v1164, 4
    %v1166 = vadd.f32 %v1164, %v1165
    %v1167 = vrot.slane %v1166, 2
    %v1168 = vadd.f32 %v1166, %v1167
    %v1169 = vrot.slane %v1168, 1
    %v1170 = vadd.f32 %v1168, %v1169
    %v1171 = vsel %vm675, %v995, 0.0
    %v1172 = vrot.slane %v1171, 4
    %v1173 = vadd.f32 %v1171, %v1172
    %v1174 = vrot.slane %v1173, 2
    %v1175 = vadd.f32 %v1173, %v1174
    %v1176 = vrot.slane %v1175, 1
    %v1177 = vadd.f32 %v1175, %v1176
    %v1178 = vsel %vm675, %v996, 0.0
    %v1179 = vrot.slane %v1178, 4
    %v1180 = vadd.f32 %v1178, %v1179
    %v1181 = vrot.slane %v1180, 2
    %v1182 = vadd.f32 %v1180, %v1181
    %v1183 = vrot.slane %v1182, 1
    %v1184 = vadd.f32 %v1182, %v1183
    %v1185 = vsel %vm675, %v997, 0.0
    %v1186 = vrot.slane %v1185, 4
    %v1187 = vadd.f32 %v1185, %v1186
    %v1188 = vrot.slane %v1187, 2
    %v1189 = vadd.f32 %v1187, %v1188
    %v1190 = vrot.slane %v1189, 1
    %v1191 = vadd.f32 %v1189, %v1190
    %v1192 = vsel %vm675, %v998, 0.0
    %v1193 = vrot.slane %v1192, 4
    %v1194 = vadd.f32 %v1192, %v1193
    %v1195 = vrot.slane %v1194, 2
    %v1196 = vadd.f32 %v1194, %v1195
    %v1197 = vrot.slane %v1196, 1
    %v1198 = vadd.f32 %v1196, %v1197
    %v1199 = vsel %vm675, %v999, 0.0
    %v1200 = vrot.slane %v1199, 4
    %v1201 = vadd.f32 %v1199, %v1200
    %v1202 = vrot.slane %v1201, 2
    %v1203 = vadd.f32 %v1201, %v1202
    %v1204 = vrot.slane %v1203, 1
    %v1205 = vadd.f32 %v1203, %v1204
    %v1206 = vsel %vm675, %v1000, 0.0
    %v1207 = vrot.slane %v1206, 4
    %v1208 = vadd.f32 %v1206, %v1207
    %v1209 = vrot.slane %v1208, 2
    %v1210 = vadd.f32 %v1208, %v1209
    %v1211 = vrot.slane %v1210, 1
    %v1212 = vadd.f32 %v1210, %v1211
    %v1213 = vsel %vm675, %v1001, 0.0
    %v1214 = vrot.slane %v1213, 4
    %v1215 = vadd.f32 %v1213, %v1214
    %v1216 = vrot.slane %v1215, 2
    %v1217 = vadd.f32 %v1215, %v1216
    %v1218 = vrot.slane %v1217, 1
    %v1219 = vadd.f32 %v1217, %v1218
    %v1220 = vsel %vm675, %v1002, 0.0
    %v1221 = vrot.slane %v1220, 4
    %v1222 = vadd.f32 %v1220, %v1221
    %v1223 = vrot.slane %v1222, 2
    %v1224 = vadd.f32 %v1222, %v1223
    %v1225 = vrot.slane %v1224, 1
    %v1226 = vadd.f32 %v1224, %v1225
    %v1227 = vmul.f32 %v1009, %v906
    %v1228 = vmul.f32 %v1016, %v906
    %v1229 = vmul.f32 %v1023, %v906
    %v1230 = vmul.f32 %v1030, %v906
    %v1231 = vmul.f32 %v1037, %v906
    %v1232 = vmul.f32 %v1044, %v906
    %v1233 = vmul.f32 %v1051, %v906
    %v1234 = vmul.f32 %v1058, %v906
    %v1235 = vmul.f32 %v1065, %v906
    %v1236 = vmul.f32 %v1072, %v906
    %v1237 = vmul.f32 %v1079, %v906
    %v1238 = vmul.f32 %v1086, %v906
    %v1239 = vmul.f32 %v1093, %v906
    %v1240 = vmul.f32 %v1100, %v906
    %v1241 = vmul.f32 %v1107, %v906
    %v1242 = vmul.f32 %v1114, %v906
    %v1243 = vmul.f32 %v1121, %v906
    %v1244 = vmul.f32 %v1128, %v906
    %v1245 = vmul.f32 %v1135, %v906
    %v1246 = vmul.f32 %v1142, %v906
    %v1247 = vmul.f32 %v1149, %v906
    %v1248 = vmul.f32 %v1156, %v906
    %v1249 = vmul.f32 %v1163, %v906
    %v1250 = vmul.f32 %v1170, %v906
    %v1251 = vmul.f32 %v1177, %v906
    %v1252 = vmul.f32 %v1184, %v906
    %v1253 = vmul.f32 %v1191, %v906
    %v1254 = vmul.f32 %v1198, %v906
    %v1255 = vmul.f32 %v1205, %v906
    %v1256 = vmul.f32 %v1212, %v906
    %v1257 = vmul.f32 %v1219, %v906
    %v1258 = vmul.f32 %v1226, %v906
    %v1259 = vld [vmem:[#allocation7] sm:$0xff]
    %v1260 = vld [vmem:[#allocation7 + $0x8] sm:$0xff]
    %v1261 = vld [vmem:[#allocation7 + $0x10] sm:$0xff]
    %v1262 = vld [vmem:[#allocation7 + $0x18] sm:$0xff]
    %v1263 = vadd.f32 %v1227, 1e-05
    %v1264 = vadd.f32 %v1228, 1e-05
    %v1265 = vadd.f32 %v1229, 1e-05
    %v1266 = vadd.f32 %v1230, 1e-05
    %v1267 = vadd.f32 %v1231, 1e-05
    %v1268 = vadd.f32 %v1232, 1e-05
    %v1269 = vadd.f32 %v1233, 1e-05
    %v1270 = vadd.f32 %v1234, 1e-05
    %v1271 = vadd.f32 %v1235, 1e-05
    %v1272 = vadd.f32 %v1236, 1e-05
    %v1273 = vadd.f32 %v1237, 1e-05
    %v1274 = vadd.f32 %v1238, 1e-05
    %v1275 = vadd.f32 %v1239, 1e-05
    %v1276 = vadd.f32 %v1240, 1e-05
    %v1277 = vadd.f32 %v1241, 1e-05
    %v1278 = vadd.f32 %v1242, 1e-05
    %v1279 = vadd.f32 %v1243, 1e-05
    %v1280 = vadd.f32 %v1244, 1e-05
    %v1281 = vadd.f32 %v1245, 1e-05
    %v1282 = vadd.f32 %v1246, 1e-05
    %v1283 = vadd.f32 %v1247, 1e-05
    %v1284 = vadd.f32 %v1248, 1e-05
    %v1285 = vadd.f32 %v1249, 1e-05
    %v1286 = vadd.f32 %v1250, 1e-05
    %v1287 = vadd.f32 %v1251, 1e-05
    %v1288 = vadd.f32 %v1252, 1e-05
    %v1289 = vadd.f32 %v1253, 1e-05
    %v1290 = vadd.f32 %v1254, 1e-05
    %v1291 = vadd.f32 %v1255, 1e-05
    %v1292 = vadd.f32 %v1256, 1e-05
    %v1293 = vadd.f32 %v1257, 1e-05
    %v1294 = vadd.f32 %v1258, 1e-05
    %v1295 = vrsqrt.pop %v1263
    %v1296 = vmul.f32 %v1295, %v1263
    %v1297 = vmul.f32 %v1296, %v1295
    %v1298 = vmul.f32 0.5, %v1297
    %v1299 = vsub.f32 1.5, %v1298
    %v1300 = vmul.f32 %v1295, %v1299
    %vm1301 = vweird.f32 %v1263
    %vm1302 = vweird.f32 %v1295
    %vm1303 = vmor %vm1301, %vm1302
    %v1304 = vsel %vm1303, %v1295, %v1300
    %v1305 = vrsqrt.pop %v1264
    %v1306 = vmul.f32 %v1305, %v1264
    %v1307 = vmul.f32 %v1306, %v1305
    %v1308 = vmul.f32 0.5, %v1307
    %v1309 = vsub.f32 1.5, %v1308
    %v1310 = vmul.f32 %v1305, %v1309
    %vm1311 = vweird.f32 %v1264
    %vm1312 = vweird.f32 %v1305
    %vm1313 = vmor %vm1311, %vm1312
    %v1314 = vsel %vm1313, %v1305, %v1310
    %v1315 = vrsqrt.pop %v1265
    %v1316 = vmul.f32 %v1315, %v1265
    %v1317 = vmul.f32 %v1316, %v1315
    %v1318 = vmul.f32 0.5, %v1317
    %v1319 = vsub.f32 1.5, %v1318
    %v1320 = vmul.f32 %v1315, %v1319
    %vm1321 = vweird.f32 %v1265
    %vm1322 = vweird.f32 %v1315
    %vm1323 = vmor %vm1321, %vm1322
    %v1324 = vsel %vm1323, %v1315, %v1320
    %v1325 = vrsqrt.pop %v1266
    %v1326 = vmul.f32 %v1325, %v1266
    %v1327 = vmul.f32 %v1326, %v1325
    %v1328 = vmul.f32 0.5, %v1327
    %v1329 = vsub.f32 1.5, %v1328
    %v1330 = vmul.f32 %v1325, %v1329
    %vm1331 = vweird.f32 %v1266
    %vm1332 = vweird.f32 %v1325
    %vm1333 = vmor %vm1331, %vm1332
    %v1334 = vsel %vm1333, %v1325, %v1330
    %v1335 = vrsqrt.pop %v1267
    %v1336 = vmul.f32 %v1335, %v1267
    %v1337 = vmul.f32 %v1336, %v1335
    %v1338 = vmul.f32 0.5, %v1337
    %v1339 = vsub.f32 1.5, %v1338
    %v1340 = vmul.f32 %v1335, %v1339
    %vm1341 = vweird.f32 %v1267
    %vm1342 = vweird.f32 %v1335
    %vm1343 = vmor %vm1341, %vm1342
    %v1344 = vsel %vm1343, %v1335, %v1340
    %v1345 = vrsqrt.pop %v1268
    %v1346 = vmul.f32 %v1345, %v1268
    %v1347 = vmul.f32 %v1346, %v1345
    %v1348 = vmul.f32 0.5, %v1347
    %v1349 = vsub.f32 1.5, %v1348
    %v1350 = vmul.f32 %v1345, %v1349
    %vm1351 = vweird.f32 %v1268
    %vm1352 = vweird.f32 %v1345
    %vm1353 = vmor %vm1351, %vm1352
    %v1354 = vsel %vm1353, %v1345, %v1350
    %v1355 = vrsqrt.pop %v1269
    %v1356 = vmul.f32 %v1355, %v1269
    %v1357 = vmul.f32 %v1356, %v1355
    %v1358 = vmul.f32 0.5, %v1357
    %v1359 = vsub.f32 1.5, %v1358
    %v1360 = vmul.f32 %v1355, %v1359
    %vm1361 = vweird.f32 %v1269
    %vm1362 = vweird.f32 %v1355
    %vm1363 = vmor %vm1361, %vm1362
    %v1364 = vsel %vm1363, %v1355, %v1360
    %v1365 = vrsqrt.pop %v1270
    %v1366 = vmul.f32 %v1365, %v1270
    %v1367 = vmul.f32 %v1366, %v1365
    %v1368 = vmul.f32 0.5, %v1367
    %v1369 = vsub.f32 1.5, %v1368
    %v1370 = vmul.f32 %v1365, %v1369
    %vm1371 = vweird.f32 %v1270
    %vm1372 = vweird.f32 %v1365
    %vm1373 = vmor %vm1371, %vm1372
    %v1374 = vsel %vm1373, %v1365, %v1370
    %v1375 = vrsqrt.pop %v1271
    %v1376 = vmul.f32 %v1375, %v1271
    %v1377 = vmul.f32 %v1376, %v1375
    %v1378 = vmul.f32 0.5, %v1377
    %v1379 = vsub.f32 1.5, %v1378
    %v1380 = vmul.f32 %v1375, %v1379
    %vm1381 = vweird.f32 %v1271
    %vm1382 = vweird.f32 %v1375
    %vm1383 = vmor %vm1381, %vm1382
    %v1384 = vsel %vm1383, %v1375, %v1380
    %v1385 = vrsqrt.pop %v1272
    %v1386 = vmul.f32 %v1385, %v1272
    %v1387 = vmul.f32 %v1386, %v1385
    %v1388 = vmul.f32 0.5, %v1387
    %v1389 = vsub.f32 1.5, %v1388
    %v1390 = vmul.f32 %v1385, %v1389
    %vm1391 = vweird.f32 %v1272
    %vm1392 = vweird.f32 %v1385
    %vm1393 = vmor %vm1391, %vm1392
    %v1394 = vsel %vm1393, %v1385, %v1390
    %v1395 = vrsqrt.pop %v1273
    %v1396 = vmul.f32 %v1395, %v1273
    %v1397 = vmul.f32 %v1396, %v1395
    %v1398 = vmul.f32 0.5, %v1397
    %v1399 = vsub.f32 1.5, %v1398
    %v1400 = vmul.f32 %v1395, %v1399
    %vm1401 = vweird.f32 %v1273
    %vm1402 = vweird.f32 %v1395
    %vm1403 = vmor %vm1401, %vm1402
    %v1404 = vsel %vm1403, %v1395, %v1400
    %v1405 = vrsqrt.pop %v1274
    %v1406 = vmul.f32 %v1405, %v1274
    %v1407 = vmul.f32 %v1406, %v1405
    %v1408 = vmul.f32 0.5, %v1407
    %v1409 = vsub.f32 1.5, %v1408
    %v1410 = vmul.f32 %v1405, %v1409
    %vm1411 = vweird.f32 %v1274
    %vm1412 = vweird.f32 %v1405
    %vm1413 = vmor %vm1411, %vm1412
    %v1414 = vsel %vm1413, %v1405, %v1410
    %v1415 = vrsqrt.pop %v1275
    %v1416 = vmul.f32 %v1415, %v1275
    %v1417 = vmul.f32 %v1416, %v1415
    %v1418 = vmul.f32 0.5, %v1417
    %v1419 = vsub.f32 1.5, %v1418
    %v1420 = vmul.f32 %v1415, %v1419
    %vm1421 = vweird.f32 %v1275
    %vm1422 = vweird.f32 %v1415
    %vm1423 = vmor %vm1421, %vm1422
    %v1424 = vsel %vm1423, %v1415, %v1420
    %v1425 = vrsqrt.pop %v1276
    %v1426 = vmul.f32 %v1425, %v1276
    %v1427 = vmul.f32 %v1426, %v1425
    %v1428 = vmul.f32 0.5, %v1427
    %v1429 = vsub.f32 1.5, %v1428
    %v1430 = vmul.f32 %v1425, %v1429
    %vm1431 = vweird.f32 %v1276
    %vm1432 = vweird.f32 %v1425
    %vm1433 = vmor %vm1431, %vm1432
    %v1434 = vsel %vm1433, %v1425, %v1430
    %v1435 = vrsqrt.pop %v1277
    %v1436 = vmul.f32 %v1435, %v1277
    %v1437 = vmul.f32 %v1436, %v1435
    %v1438 = vmul.f32 0.5, %v1437
    %v1439 = vsub.f32 1.5, %v1438
    %v1440 = vmul.f32 %v1435, %v1439
    %vm1441 = vweird.f32 %v1277
    %vm1442 = vweird.f32 %v1435
    %vm1443 = vmor %vm1441, %vm1442
    %v1444 = vsel %vm1443, %v1435, %v1440
    %v1445 = vrsqrt.pop %v1278
    %v1446 = vmul.f32 %v1445, %v1278
    %v1447 = vmul.f32 %v1446, %v1445
    %v1448 = vmul.f32 0.5, %v1447
    %v1449 = vsub.f32 1.5, %v1448
    %v1450 = vmul.f32 %v1445, %v1449
    %vm1451 = vweird.f32 %v1278
    %vm1452 = vweird.f32 %v1445
    %vm1453 = vmor %vm1451, %vm1452
    %v1454 = vsel %vm1453, %v1445, %v1450
    %v1455 = vrsqrt.pop %v1279
    %v1456 = vmul.f32 %v1455, %v1279
    %v1457 = vmul.f32 %v1456, %v1455
    %v1458 = vmul.f32 0.5, %v1457
    %v1459 = vsub.f32 1.5, %v1458
    %v1460 = vmul.f32 %v1455, %v1459
    %vm1461 = vweird.f32 %v1279
    %vm1462 = vweird.f32 %v1455
    %vm1463 = vmor %vm1461, %vm1462
    %v1464 = vsel %vm1463, %v1455, %v1460
    %v1465 = vrsqrt.pop %v1280
    %v1466 = vmul.f32 %v1465, %v1280
    %v1467 = vmul.f32 %v1466, %v1465
    %v1468 = vmul.f32 0.5, %v1467
    %v1469 = vsub.f32 1.5, %v1468
    %v1470 = vmul.f32 %v1465, %v1469
    %vm1471 = vweird.f32 %v1280
    %vm1472 = vweird.f32 %v1465
    %vm1473 = vmor %vm1471, %vm1472
    %v1474 = vsel %vm1473, %v1465, %v1470
    %v1475 = vrsqrt.pop %v1281
    %v1476 = vmul.f32 %v1475, %v1281
    %v1477 = vmul.f32 %v1476, %v1475
    %v1478 = vmul.f32 0.5, %v1477
    %v1479 = vsub.f32 1.5, %v1478
    %v1480 = vmul.f32 %v1475, %v1479
    %vm1481 = vweird.f32 %v1281
    %vm1482 = vweird.f32 %v1475
    %vm1483 = vmor %vm1481, %vm1482
    %v1484 = vsel %vm1483, %v1475, %v1480
    %v1485 = vrsqrt.pop %v1282
    %v1486 = vmul.f32 %v1485, %v1282
    %v1487 = vmul.f32 %v1486, %v1485
    %v1488 = vmul.f32 0.5, %v1487
    %v1489 = vsub.f32 1.5, %v1488
    %v1490 = vmul.f32 %v1485, %v1489
    %vm1491 = vweird.f32 %v1282
    %vm1492 = vweird.f32 %v1485
    %vm1493 = vmor %vm1491, %vm1492
    %v1494 = vsel %vm1493, %v1485, %v1490
    %v1495 = vrsqrt.pop %v1283
    %v1496 = vmul.f32 %v1495, %v1283
    %v1497 = vmul.f32 %v1496, %v1495
    %v1498 = vmul.f32 0.5, %v1497
    %v1499 = vsub.f32 1.5, %v1498
    %v1500 = vmul.f32 %v1495, %v1499
    %vm1501 = vweird.f32 %v1283
    %vm1502 = vweird.f32 %v1495
    %vm1503 = vmor %vm1501, %vm1502
    %v1504 = vsel %vm1503, %v1495, %v1500
    %v1505 = vrsqrt.pop %v1284
    %v1506 = vmul.f32 %v1505, %v1284
    %v1507 = vmul.f32 %v1506, %v1505
    %v1508 = vmul.f32 0.5, %v1507
    %v1509 = vsub.f32 1.5, %v1508
    %v1510 = vmul.f32 %v1505, %v1509
    %vm1511 = vweird.f32 %v1284
    %vm1512 = vweird.f32 %v1505
    %vm1513 = vmor %vm1511, %vm1512
    %v1514 = vsel %vm1513, %v1505, %v1510
    %v1515 = vrsqrt.pop %v1285
    %v1516 = vmul.f32 %v1515, %v1285
    %v1517 = vmul.f32 %v1516, %v1515
    %v1518 = vmul.f32 0.5, %v1517
    %v1519 = vsub.f32 1.5, %v1518
    %v1520 = vmul.f32 %v1515, %v1519
    %vm1521 = vweird.f32 %v1285
    %vm1522 = vweird.f32 %v1515
    %vm1523 = vmor %vm1521, %vm1522
    %v1524 = vsel %vm1523, %v1515, %v1520
    %v1525 = vrsqrt.pop %v1286
    %v1526 = vmul.f32 %v1525, %v1286
    %v1527 = vmul.f32 %v1526, %v1525
    %v1528 = vmul.f32 0.5, %v1527
    %v1529 = vsub.f32 1.5, %v1528
    %v1530 = vmul.f32 %v1525, %v1529
    %vm1531 = vweird.f32 %v1286
    %vm1532 = vweird.f32 %v1525
    %vm1533 = vmor %vm1531, %vm1532
    %v1534 = vsel %vm1533, %v1525, %v1530
    %v1535 = vrsqrt.pop %v1287
    %v1536 = vmul.f32 %v1535, %v1287
    %v1537 = vmul.f32 %v1536, %v1535
    %v1538 = vmul.f32 0.5, %v1537
    %v1539 = vsub.f32 1.5, %v1538
    %v1540 = vmul.f32 %v1535, %v1539
    %vm1541 = vweird.f32 %v1287
    %vm1542 = vweird.f32 %v1535
    %vm1543 = vmor %vm1541, %vm1542
    %v1544 = vsel %vm1543, %v1535, %v1540
    %v1545 = vrsqrt.pop %v1288
    %v1546 = vmul.f32 %v1545, %v1288
    %v1547 = vmul.f32 %v1546, %v1545
    %v1548 = vmul.f32 0.5, %v1547
    %v1549 = vsub.f32 1.5, %v1548
    %v1550 = vmul.f32 %v1545, %v1549
    %vm1551 = vweird.f32 %v1288
    %vm1552 = vweird.f32 %v1545
    %vm1553 = vmor %vm1551, %vm1552
    %v1554 = vsel %vm1553, %v1545, %v1550
    %v1555 = vrsqrt.pop %v1289
    %v1556 = vmul.f32 %v1555, %v1289
    %v1557 = vmul.f32 %v1556, %v1555
    %v1558 = vmul.f32 0.5, %v1557
    %v1559 = vsub.f32 1.5, %v1558
    %v1560 = vmul.f32 %v1555, %v1559
    %vm1561 = vweird.f32 %v1289
    %vm1562 = vweird.f32 %v1555
    %vm1563 = vmor %vm1561, %vm1562
    %v1564 = vsel %vm1563, %v1555, %v1560
    %v1565 = vrsqrt.pop %v1290
    %v1566 = vmul.f32 %v1565, %v1290
    %v1567 = vmul.f32 %v1566, %v1565
    %v1568 = vmul.f32 0.5, %v1567
    %v1569 = vsub.f32 1.5, %v1568
    %v1570 = vmul.f32 %v1565, %v1569
    %vm1571 = vweird.f32 %v1290
    %vm1572 = vweird.f32 %v1565
    %vm1573 = vmor %vm1571, %vm1572
    %v1574 = vsel %vm1573, %v1565, %v1570
    %v1575 = vrsqrt.pop %v1291
    %v1576 = vmul.f32 %v1575, %v1291
    %v1577 = vmul.f32 %v1576, %v1575
    %v1578 = vmul.f32 0.5, %v1577
    %v1579 = vsub.f32 1.5, %v1578
    %v1580 = vmul.f32 %v1575, %v1579
    %vm1581 = vweird.f32 %v1291
    %vm1582 = vweird.f32 %v1575
    %vm1583 = vmor %vm1581, %vm1582
    %v1584 = vsel %vm1583, %v1575, %v1580
    %v1585 = vrsqrt.pop %v1292
    %v1586 = vmul.f32 %v1585, %v1292
    %v1587 = vmul.f32 %v1586, %v1585
    %v1588 = vmul.f32 0.5, %v1587
    %v1589 = vsub.f32 1.5, %v1588
    %v1590 = vmul.f32 %v1585, %v1589
    %vm1591 = vweird.f32 %v1292
    %vm1592 = vweird.f32 %v1585
    %vm1593 = vmor %vm1591, %vm1592
    %v1594 = vsel %vm1593, %v1585, %v1590
    %v1595 = vrsqrt.pop %v1293
    %v1596 = vmul.f32 %v1595, %v1293
    %v1597 = vmul.f32 %v1596, %v1595
    %v1598 = vmul.f32 0.5, %v1597
    %v1599 = vsub.f32 1.5, %v1598
    %v1600 = vmul.f32 %v1595, %v1599
    %vm1601 = vweird.f32 %v1293
    %vm1602 = vweird.f32 %v1595
    %vm1603 = vmor %vm1601, %vm1602
    %v1604 = vsel %vm1603, %v1595, %v1600
    %v1605 = vrsqrt.pop %v1294
    %v1606 = vmul.f32 %v1605, %v1294
    %v1607 = vmul.f32 %v1606, %v1605
    %v1608 = vmul.f32 0.5, %v1607
    %v1609 = vsub.f32 1.5, %v1608
    %v1610 = vmul.f32 %v1605, %v1609
    %vm1611 = vweird.f32 %v1294
    %vm1612 = vweird.f32 %v1605
    %vm1613 = vmor %vm1611, %vm1612
    %v1614 = vsel %vm1613, %v1605, %v1610
    %v1647 = vrot.slane %v1314, 7
    %v1648 = vrot.slane %v1324, 6
    %v1649 = vrot.slane %v1334, 5
    %v1650 = vrot.slane %v1344, 4
    %v1651 = vrot.slane %v1354, 3
    %v1652 = vrot.slane %v1364, 2
    %v1653 = vrot.slane %v1374, 1
    %v1654 = vrot.slane %v1394, 7
    %v1655 = vrot.slane %v1404, 6
    %v1656 = vrot.slane %v1414, 5
    %v1657 = vrot.slane %v1424, 4
    %v1658 = vrot.slane %v1434, 3
    %v1659 = vrot.slane %v1444, 2
    %v1660 = vrot.slane %v1454, 1
    %v1661 = vrot.slane %v1474, 7
    %v1662 = vrot.slane %v1484, 6
    %v1663 = vrot.slane %v1494, 5
    %v1664 = vrot.slane %v1504, 4
    %v1665 = vrot.slane %v1514, 3
    %v1666 = vrot.slane %v1524, 2
    %v1667 = vrot.slane %v1534, 1
    %v1668 = vrot.slane %v1554, 7
    %v1669 = vrot.slane %v1564, 6
    %v1670 = vrot.slane %v1574, 5
    %v1671 = vrot.slane %v1584, 4
    %v1672 = vrot.slane %v1594, 3
    %v1673 = vrot.slane %v1604, 2
    %v1674 = vrot.slane %v1614, 1
    %vm1675 = vcmask 1040384
    %v1676 = vsel %vm1675, %v1304, %v1647
    %vm1677 = vcmask 1042434
    %v1678 = vsel %vm1677, %v1648, %v1649
    %v1679 = vsel %vm675, %v1676, %v1678
    %vm1680 = vcmask 1044484
    %v1681 = vsel %vm1680, %v1650, %v1651
    %vm1682 = vcmask 1046534
    %v1683 = vsel %vm1682, %v1652, %v1653
    %vm1684 = vcmask 1045508
    %v1685 = vsel %vm1684, %v1681, %v1683
    %vm1686 = vcmask 1043456
    %v1687 = vsel %vm1686, %v1679, %v1685
    %v1688 = vsel %vm1675, %v1384, %v1654
    %v1689 = vsel %vm1677, %v1655, %v1656
    %v1690 = vsel %vm675, %v1688, %v1689
    %v1691 = vsel %vm1680, %v1657, %v1658
    %v1692 = vsel %vm1682, %v1659, %v1660
    %v1693 = vsel %vm1684, %v1691, %v1692
    %v1694 = vsel %vm1686, %v1690, %v1693
    %v1695 = vsel %vm1675, %v1464, %v1661
    %v1696 = vsel %vm1677, %v1662, %v1663
    %v1697 = vsel %vm675, %v1695, %v1696
    %v1698 = vsel %vm1680, %v1664, %v1665
    %v1699 = vsel %vm1682, %v1666, %v1667
    %v1700 = vsel %vm1684, %v1698, %v1699
    %v1701 = vsel %vm1686, %v1697, %v1700
    %v1702 = vsel %vm1675, %v1544, %v1668
    %v1703 = vsel %vm1677, %v1669, %v1670
    %v1704 = vsel %vm675, %v1702, %v1703
    %v1705 = vsel %vm1680, %v1671, %v1672
    %v1706 = vsel %vm1682, %v1673, %v1674
    %v1707 = vsel %vm1684, %v1705, %v1706
    %v1708 = vsel %vm1686, %v1704, %v1707
    %v1713 = vmul.f32 %v1259, %v1687
    %v1714 = vmul.f32 %v1260, %v1694
    %v1715 = vmul.f32 %v1261, %v1701
    %v1716 = vmul.f32 %v1262, %v1708
    %v1721 = vperm.slane %v1713, 0
    %v1722 = vperm.slane %v1713, 1
    %v1723 = vperm.slane %v1713, 2
    %v1724 = vperm.slane %v1713, 3
    %v1725 = vperm.slane %v1713, 4
    %v1726 = vperm.slane %v1713, 5
    %v1727 = vperm.slane %v1713, 6
    %v1728 = vperm.slane %v1713, 7
    %v1729 = vperm.slane %v1714, 0
    %v1730 = vperm.slane %v1714, 1
    %v1731 = vperm.slane %v1714, 2
    %v1732 = vperm.slane %v1714, 3
    %v1733 = vperm.slane %v1714, 4
    %v1734 = vperm.slane %v1714, 5
    %v1735 = vperm.slane %v1714, 6
    %v1736 = vperm.slane %v1714, 7
    %v1737 = vperm.slane %v1715, 0
    %v1738 = vperm.slane %v1715, 1
    %v1739 = vperm.slane %v1715, 2
    %v1740 = vperm.slane %v1715, 3
    %v1741 = vperm.slane %v1715, 4
    %v1742 = vperm.slane %v1715, 5
    %v1743 = vperm.slane %v1715, 6
    %v1744 = vperm.slane %v1715, 7
    %v1745 = vperm.slane %v1716, 0
    %v1746 = vperm.slane %v1716, 1
    %v1747 = vperm.slane %v1716, 2
    %v1748 = vperm.slane %v1716, 3
    %v1749 = vperm.slane %v1716, 4
    %v1750 = vperm.slane %v1716, 5
    %v1751 = vperm.slane %v1716, 6
    %v1752 = vperm.slane %v1716, 7
    %v1785 = vmul.f32 %v1721, %v939
    %v1786 = vmul.f32 %v1722, %v940
    %v1787 = vmul.f32 %v1723, %v941
    %v1788 = vmul.f32 %v1724, %v942
    %v1789 = vmul.f32 %v1725, %v943
    %v1790 = vmul.f32 %v1726, %v944
    %v1791 = vmul.f32 %v1727, %v945
    %v1792 = vmul.f32 %v1728, %v946
    %v1793 = vmul.f32 %v1729, %v947
    %v1794 = vmul.f32 %v1730, %v948
    %v1795 = vmul.f32 %v1731, %v949
    %v1796 = vmul.f32 %v1732, %v950
    %v1797 = vmul.f32 %v1733, %v951
    %v1798 = vmul.f32 %v1734, %v952
    %v1799 = vmul.f32 %v1735, %v953
    %v1800 = vmul.f32 %v1736, %v954
    %v1801 = vmul.f32 %v1737, %v955
    %v1802 = vmul.f32 %v1738, %v956
    %v1803 = vmul.f32 %v1739, %v957
    %v1804 = vmul.f32 %v1740, %v958
    %v1805 = vmul.f32 %v1741, %v959
    %v1806 = vmul.f32 %v1742, %v960
    %v1807 = vmul.f32 %v1743, %v961
    %v1808 = vmul.f32 %v1744, %v962
    %v1809 = vmul.f32 %v1745, %v963
    %v1810 = vmul.f32 %v1746, %v964
    %v1811 = vmul.f32 %v1747, %v965
    %v1812 = vmul.f32 %v1748, %v966
    %v1813 = vmul.f32 %v1749, %v967
    %v1814 = vmul.f32 %v1750, %v968
    %v1815 = vmul.f32 %v1751, %v969
    %v1816 = vmul.f32 %v1752, %v970
    %v1817 = vld [vmem:[#allocation8] sm:$0xff]
    %v1818 = vld [vmem:[#allocation8 + $0x8] sm:$0xff]
    %v1819 = vld [vmem:[#allocation8 + $0x10] sm:$0xff]
    %v1820 = vld [vmem:[#allocation8 + $0x18] sm:$0xff]
    %v1825 = vperm.slane %v1817, 0
    %v1826 = vperm.slane %v1817, 1
    %v1827 = vperm.slane %v1817, 2
    %v1828 = vperm.slane %v1817, 3
    %v1829 = vperm.slane %v1817, 4
    %v1830 = vperm.slane %v1817, 5
    %v1831 = vperm.slane %v1817, 6
    %v1832 = vperm.slane %v1817, 7
    %v1833 = vperm.slane %v1818, 0
    %v1834 = vperm.slane %v1818, 1
    %v1835 = vperm.slane %v1818, 2
    %v1836 = vperm.slane %v1818, 3
    %v1837 = vperm.slane %v1818, 4
    %v1838 = vperm.slane %v1818, 5
    %v1839 = vperm.slane %v1818, 6
    %v1840 = vperm.slane %v1818, 7
    %v1841 = vperm.slane %v1819, 0
    %v1842 = vperm.slane %v1819, 1
    %v1843 = vperm.slane %v1819, 2
    %v1844 = vperm.slane %v1819, 3
    %v1845 = vperm.slane %v1819, 4
    %v1846 = vperm.slane %v1819, 5
    %v1847 = vperm.slane %v1819, 6
    %v1848 = vperm.slane %v1819, 7
    %v1849 = vperm.slane %v1820, 0
    %v1850 = vperm.slane %v1820, 1
    %v1851 = vperm.slane %v1820, 2
    %v1852 = vperm.slane %v1820, 3
    %v1853 = vperm.slane %v1820, 4
    %v1854 = vperm.slane %v1820, 5
    %v1855 = vperm.slane %v1820, 6
    %v1856 = vperm.slane %v1820, 7
    %v1889 = vadd.f32 %v1785, %v1825
    %v1890 = vadd.f32 %v1786, %v1826
    %v1891 = vadd.f32 %v1787, %v1827
    %v1892 = vadd.f32 %v1788, %v1828
    %v1893 = vadd.f32 %v1789, %v1829
    %v1894 = vadd.f32 %v1790, %v1830
    %v1895 = vadd.f32 %v1791, %v1831
    %v1896 = vadd.f32 %v1792, %v1832
    %v1897 = vadd.f32 %v1793, %v1833
    %v1898 = vadd.f32 %v1794, %v1834
    %v1899 = vadd.f32 %v1795, %v1835
    %v1900 = vadd.f32 %v1796, %v1836
    %v1901 = vadd.f32 %v1797, %v1837
    %v1902 = vadd.f32 %v1798, %v1838
    %v1903 = vadd.f32 %v1799, %v1839
    %v1904 = vadd.f32 %v1800, %v1840
    %v1905 = vadd.f32 %v1801, %v1841
    %v1906 = vadd.f32 %v1802, %v1842
    %v1907 = vadd.f32 %v1803, %v1843
    %v1908 = vadd.f32 %v1804, %v1844
    %v1909 = vadd.f32 %v1805, %v1845
    %v1910 = vadd.f32 %v1806, %v1846
    %v1911 = vadd.f32 %v1807, %v1847
    %v1912 = vadd.f32 %v1808, %v1848
    %v1913 = vadd.f32 %v1809, %v1849
    %v1914 = vadd.f32 %v1810, %v1850
    %v1915 = vadd.f32 %v1811, %v1851
    %v1916 = vadd.f32 %v1812, %v1852
    %v1917 = vadd.f32 %v1813, %v1853
    %v1918 = vadd.f32 %v1814, %v1854
    %v1919 = vadd.f32 %v1815, %v1855
    %v1920 = vadd.f32 %v1816, %v1856
    %v1953 = vrot.slane %v1890, 6
    %v1954 = vrot.slane %v1891, 4
    %v1955 = vrot.slane %v1892, 2
    %v1956 = vrot.slane %v1894, 6
    %v1957 = vrot.slane %v1895, 4
    %v1958 = vrot.slane %v1896, 2
    %v1959 = vrot.slane %v1898, 6
    %v1960 = vrot.slane %v1899, 4
    %v1961 = vrot.slane %v1900, 2
    %v1962 = vrot.slane %v1902, 6
    %v1963 = vrot.slane %v1903, 4
    %v1964 = vrot.slane %v1904, 2
    %v1965 = vrot.slane %v1906, 6
    %v1966 = vrot.slane %v1907, 4
    %v1967 = vrot.slane %v1908, 2
    %v1968 = vrot.slane %v1910, 6
    %v1969 = vrot.slane %v1911, 4
    %v1970 = vrot.slane %v1912, 2
    %v1971 = vrot.slane %v1914, 6
    %v1972 = vrot.slane %v1915, 4
    %v1973 = vrot.slane %v1916, 2
    %v1974 = vrot.slane %v1918, 6
    %v1975 = vrot.slane %v1919, 4
    %v1976 = vrot.slane %v1920, 2
    %v1977 = vsel %vm675, %v1889, %v1953
    %v1978 = vsel %vm1684, %v1954, %v1955
    %v1979 = vsel %vm1686, %v1977, %v1978
    %v1980 = vsel %vm675, %v1893, %v1956
    %v1981 = vsel %vm1684, %v1957, %v1958
    %v1982 = vsel %vm1686, %v1980, %v1981
    %v1983 = vsel %vm675, %v1897, %v1959
    %v1984 = vsel %vm1684, %v1960, %v1961
    %v1985 = vsel %vm1686, %v1983, %v1984
    %v1986 = vsel %vm675, %v1901, %v1962
    %v1987 = vsel %vm1684, %v1963, %v1964
    %v1988 = vsel %vm1686, %v1986, %v1987
    %v1989 = vsel %vm675, %v1905, %v1965
    %v1990 = vsel %vm1684, %v1966, %v1967
    %v1991 = vsel %vm1686, %v1989, %v1990
    %v1992 = vsel %vm675, %v1909, %v1968
    %v1993 = vsel %vm1684, %v1969, %v1970
    %v1994 = vsel %vm1686, %v1992, %v1993
    %v1995 = vsel %vm675, %v1913, %v1971
    %v1996 = vsel %vm1684, %v1972, %v1973
    %v1997 = vsel %vm1686, %v1995, %v1996
    %v1998 = vsel %vm675, %v1917, %v1974
    %v1999 = vsel %vm1684, %v1975, %v1976
    %v2000 = vsel %vm1686, %v1998, %v1999
    %2009 = vst [vmem:[#allocation10] sm:$0xff] %v1979
    %2010 = vst [vmem:[#allocation10 + $0x8] sm:$0xff] %v1982
    %2011 = vst [vmem:[#allocation10 + $0x10] sm:$0xff] %v1985
    %2012 = vst [vmem:[#allocation10 + $0x18] sm:$0xff] %v1988
    %2013 = vst [vmem:[#allocation10 + $0x20] sm:$0xff] %v1991
    %2014 = vst [vmem:[#allocation10 + $0x28] sm:$0xff] %v1994
    %2015 = vst [vmem:[#allocation10 + $0x30] sm:$0xff] %v1997
    %2016 = vst [vmem:[#allocation10 + $0x38] sm:$0xff] %v2000
    // Predicated region
    $region34: #{tpu_custom_call.1} parent=1 // pred_check
      _
    $region35: #{tpu_custom_call.1} parent=1 // pred_check_branch
      %2018 = sbr.rel (0) target = $region37
    $region36: #{tpu_custom_call.1} parent=1 // pred_region
      %2020 = vsyncadd [#allocation4], 0
      %s2022 = sshll.u32 [#allocation10], 4
      %s2023 = int_to_ptr.vmem [resolvable:$true] %s2022
      %s2024 = sshll.u32 %s4, 4
      %s2025 = int_to_ptr.hbm [resolvable:$true] %s2024
      %2027 = dma.vmem_to_hbm [thread:$0]  %s2023, 1024, %s2025, [#allocation4]
    $region37: #{tpu_custom_call.1} parent=1 // pred_fallthru
      _
    // Predicated region
    $region38: #{tpu_custom_call.1} parent=1 // pred_check
      _
    $region39: #{tpu_custom_call.1} parent=1 // pred_check_branch
      %2029 = sbr.rel (0) target = $region41
    $region40: #{tpu_custom_call.1} parent=1 // pred_region
      %2031 = dma.done [#allocation4], 1024
    $region41: #{tpu_custom_call.1} parent=1 // pred_fallthru
      _
    %2032 = vsyncpa [#allocation3], 1
    %2033 = vsyncpa [#allocation6], 1
    %2034 = vsyncpa [#allocation9], 1
    %2035 = vsyncpa [#allocation4], 1

</llo_original>
